<compile_context>
chip_gen: v7x
topology: tpu7x:2x2x1
jax: 0.10.0
libtpu: 0.0.40
codegen_flags: <defaults>
</compile_context>

<pallas_src>
import functools

import numpy as np

import jax
import jax.numpy as jnp
from jax import lax
from jax.experimental import pallas as pl
from jax.experimental.pallas import tpu as pltpu


# ------------------------------ fused kernel --------------------------------
def _fused_block_kernel(x_ref, w0_ref, w1_ref, w2_ref, w3_ref,
                        b_ref, g_ref, bt_ref, out_ref, slab_ref,
                        *, n_ch, B, H, W, ksize, eps, mxu_dtype):
    """Whole ConvBlockINEDense forward for B samples stacked on sublanes.

    Layout: (sample, channel) on sublanes, flattened spatial (H*W) on lanes.
      x_ref      : (1, B*n_ch, hw)                 input tile
      w{s}_ref   : (B*n_ch, (s+1)*taps*B*n_ch)     block-diag packed conv weights (bf16)
      b_ref      : (4, B*n_ch, 1)  f32             conv biases (tiled over samples)
      g_ref      : (3, B*n_ch, 1)  f32             IN gammas (stages 1..3)
      bt_ref     : (3, B*n_ch, 1)  f32             IN betas  (stages 1..3)
      out_ref    : (1, B*n_ch, hw)                 output tile
      slab_ref   : (4*taps*B*n_ch, hw) VMEM bf16   persistent im2col feature slab
    """
    taps = ksize * ksize
    pad = (ksize - 1) // 2
    hw = H * W
    rows = B * n_ch                 # sublane rows of a feature tile (8 for B=2)
    rpb = taps * rows               # slab rows per dense block
    w_refs = (w0_ref, w1_ref, w2_ref, w3_ref)

    # W-wrap boundary masks, hoisted (JAX does not CSE broadcasts / iotas).
    col = lax.broadcasted_iota(jnp.int32, (rows, hw), 1)
    wcol = col % W
    wrap_mask = {}
    for dw in range(-pad, pad + 1):
        if dw > 0:
            wrap_mask[dw] = wcol >= (W - dw)
        elif dw < 0:
            wrap_mask[dw] = wcol < (-dw)

    def tap_shift(feat, dh, dw):
        # out[:, h*W + w] = feat[:, ((h+dh)%H)*W + ((w+dw)%W)]
        # Flat roll handles the H wrap exactly; the W wrap needs a fix on the
        # |dw| boundary columns (second roll shifted by +/-W, selected by mask).
        s_main = (-(dh * W + dw)) % hw
        main = pltpu.roll(feat, shift=s_main, axis=1) if s_main else feat
        if dw == 0:
            return main
        s_fix = (s_main + (W if dw > 0 else -W)) % hw
        fix = pltpu.roll(feat, shift=s_fix, axis=1) if s_fix else feat
        return jnp.where(wrap_mask[dw], fix, main)

    def write_block(feat, block_idx):
        # feat: (rows, hw) f32 -> store its `taps` circularly shifted copies
        # (the im2col rows of this dense block) into the slab as bf16.
        base = block_idx * rpb
        for t in range(taps):
            dh, dw = t // ksize - pad, t % ksize - pad
            shifted = tap_shift(feat, dh, dw).astype(mxu_dtype)
            slab_ref[base + t * rows: base + (t + 1) * rows, :] = shifted

    def stage(s, act_norm):
        # One lane-dense MXU matmul for the whole stage (both samples at once
        # via the block-diagonal weight); K trimmed to the rows written so far.
        k = (s + 1) * rpb
        y = jnp.dot(w_refs[s][...], slab_ref[:k, :],
                    preferred_element_type=jnp.float32)
        y = y + b_ref[s]                                    # (rows,hw)+(rows,1)
        if act_norm:
            y = jnp.maximum(y, 0.0)                         # ReLU
            # InstanceNorm2d (biased var, eps inside rsqrt): one-pass f32 stats.
            inv_hw = 1.0 / hw
            s1 = jnp.sum(y, axis=-1, keepdims=True)
            s2 = jnp.sum(y * y, axis=-1, keepdims=True)
            mean = s1 * inv_hw
            var = jnp.maximum(s2 * inv_hw - mean * mean, 0.0)
            scale = lax.rsqrt(var + eps) * g_ref[s]
            y = y * scale + (bt_ref[s] - mean * scale)
        return y

    write_block(x_ref[0].astype(jnp.float32), 0)            # block 0 = x
    x1 = stage(0, True)
    write_block(x1, 1)                                      # block 1 = x1
    x2 = stage(1, True)
    write_block(x2, 2)                                      # block 2 = x2
    x3 = stage(2, True)
    write_block(x3, 3)                                      # block 3 = x3
    out_ref[0] = stage(3, False).astype(out_ref.dtype)      # conv4: no act/norm


# ------------------------------ host helpers --------------------------------
def _pack_weight_bd(w, n_ch, B, taps, ksize):
    """torch conv weight (Cout, Cin, kh, kw) with input-channel blocks ordered
    [x_{i-1}, ..., x1, x]  ->  block-diagonal (B*n_ch, nb*taps*B*n_ch) matrix
    matching the slab rows: row = j*n_ch + co (sample j, out-channel co),
    col = ((b*taps + t)*B + jj)*n_ch + ci, value = w[co, (s-b)-block, t, ci]
    iff jj == j (block order in the slab is [x, x1, x2, x3])."""
    cout, cin, kh, kw = w.shape
    nb = cin // n_ch
    wb = w.reshape(cout, nb, n_ch, kh, kw)[:, ::-1]          # -> block order [x, x1, ...]
    wt = jnp.transpose(wb, (1, 3, 4, 2, 0)).reshape(nb, taps, n_ch, n_ch)  # (b,t,ci,co)
    eyeB = jnp.eye(B, dtype=w.dtype)                         # (j, jj)
    a = jnp.einsum("btic,jx->jcbtxi", wt, eyeB)              # (j,co,b,t,jj,ci)
    return a.reshape(B * n_ch, nb * taps * B * n_ch)


def _tile_rows(v, B):
    """(n_ch,) per-channel vector -> (B*n_ch, 1) tiled over the sample axis."""
    v = jnp.asarray(v, jnp.float32)
    return jnp.tile(v.reshape(1, -1), (B, 1)).reshape(-1, 1)


# -------------------------------- wrapper ------------------------------------
def conv_block_ine_dense(x, params, *, ksize=3, eps=1e-5,
                         mxu_dtype=jnp.bfloat16, samples_per_step=None):
    """Forward pass of ConvBlockINEDense (act='relu', norm='in', circular pad).

    x: (N, C, H, W) NCHW, same as the PyTorch module.  Returns (N, C, H, W).
    """
    N, n_ch, H, W = x.shape
    taps = ksize * ksize
    hw = H * W
    B = samples_per_step if samples_per_step is not None else (2 if N % 2 == 0 else 1)
    assert N % B == 0, "batch must be divisible by samples_per_step"
    rows = B * n_ch
    rpb = taps * rows
    grid_steps = N // B

    w_stages = [_pack_weight_bd(params[f"w{i}"], n_ch, B, taps, ksize).astype(mxu_dtype)
                for i in range(1, 5)]                               # (rows, (i)*rpb)
    b_all = jnp.stack([_tile_rows(params[f"b{i}"], B) for i in range(1, 5)])
    g_all = jnp.stack([_tile_rows(params[f"g{i}"], B) for i in range(1, 4)])
    bt_all = jnp.stack([_tile_rows(params[f"bt{i}"], B) for i in range(1, 4)])

    # (N, C, hw) -> (N/B, B*C, hw): B samples stacked on the sublane axis.
    x_flat = x.reshape(grid_steps, rows, hw)

    kernel = functools.partial(_fused_block_kernel, n_ch=n_ch, B=B, H=H, W=W,
                               ksize=ksize, eps=eps, mxu_dtype=mxu_dtype)

    const2 = lambda n: (0, 0)
    const3 = lambda n: (0, 0, 0)
    in_specs = [pl.BlockSpec((1, rows, hw), lambda n: (n, 0, 0))]
    in_specs += [pl.BlockSpec(w.shape, const2) for w in w_stages]    # resident consts
    in_specs += [pl.BlockSpec(b_all.shape, const3),
                 pl.BlockSpec(g_all.shape, const3),
                 pl.BlockSpec(bt_all.shape, const3)]

    # Advisory cost hint for XLA's scheduler around the custom call.
    flops = 2 * rows * hw * rpb * (1 + 2 + 3 + 4) * grid_steps
    param_bytes = sum(int(np.prod(a.shape)) * a.dtype.itemsize
                      for a in (*w_stages, b_all, g_all, bt_all))
    bytes_accessed = 2 * N * n_ch * hw * x.dtype.itemsize + param_bytes
    cost = pl.CostEstimate(flops=flops, transcendentals=3 * rows * grid_steps,
                           bytes_accessed=bytes_accessed)

    out_flat = pl.pallas_call(
        kernel,
        out_shape=jax.ShapeDtypeStruct((grid_steps, rows, hw), x.dtype),
        grid_spec=pltpu.PrefetchScalarGridSpec(
            num_scalar_prefetch=0,
            grid=(grid_steps,),
            in_specs=in_specs,
            out_specs=pl.BlockSpec((1, rows, hw), lambda n: (n, 0, 0)),
            scratch_shapes=[pltpu.VMEM((4 * rpb, hw), mxu_dtype)],
        ),
        compiler_params=pltpu.CompilerParams(
            dimension_semantics=("parallel",),
        ),
        cost_estimate=cost,
    )(x_flat, *w_stages, b_all, g_all, bt_all)

    return out_flat.reshape(N, n_ch, H, W)


# ---------------- pure-JAX reference (torch-faithful, NCHW) ------------------
def _ref_stage(x_cat, w, b, gamma, beta, act_norm, eps=1e-5, mxu_dtype=None):
    pad = (w.shape[-1] - 1) // 2
    if mxu_dtype is not None:            # mirror the kernel's MXU-operand rounding
        x_cat = x_cat.astype(mxu_dtype)
        w = w.astype(mxu_dtype)
    xp = jnp.pad(x_cat, ((0, 0), (0, 0), (pad, pad), (pad, pad)), mode="wrap")
    y = lax.conv_general_dilated(xp, w, (1, 1), "VALID",
                                 dimension_numbers=("NCHW", "OIHW", "NCHW"),
                                 preferred_element_type=jnp.float32)
    y = y + b.reshape(1, -1, 1, 1)
    if act_norm:
        y = jnp.maximum(y, 0.0)
        mean = jnp.mean(y, axis=(2, 3), keepdims=True)
        var = jnp.mean((y - mean) ** 2, axis=(2, 3), keepdims=True)
        y = (y - mean) * lax.rsqrt(var + eps)
        y = y * gamma.reshape(1, -1, 1, 1) + beta.reshape(1, -1, 1, 1)
    return y


def _ref_block(x, p, mxu_dtype=None):
    x1 = _ref_stage(x, p["w1"], p["b1"], p["g1"], p["bt1"], True, mxu_dtype=mxu_dtype)
    x2 = _ref_stage(jnp.concatenate([x1, x], 1), p["w2"], p["b2"], p["g2"],
                    p["bt2"], True, mxu_dtype=mxu_dtype)
    x3 = _ref_stage(jnp.concatenate([x2, x1, x], 1), p["w3"], p["b3"], p["g3"],
                    p["bt3"], True, mxu_dtype=mxu_dtype)
    return _ref_stage(jnp.concatenate([x3, x2, x1, x], 1), p["w4"], p["b4"],
                      None, None, False, mxu_dtype=mxu_dtype)


# ------------------------------ parameter init -------------------------------
def init_params(key, n_ch, ksize=3, dtype=jnp.float32):
    """Torch-layout params: w_i (Cout, Cin_i, k, k) with torch concat channel
    order [x_{i-1}, ..., x1, x]; b/g/bt are (n_ch,)."""
    params = {}
    cins = [n_ch, 2 * n_ch, 3 * n_ch, 4 * n_ch]
    keys = jax.random.split(key, 14)
    ki = 0
    for i, cin in enumerate(cins, start=1):
        scale = 1.0 / np.sqrt(cin * ksize * ksize)
        params[f"w{i}"] = (jax.random.normal(keys[ki], (n_ch, cin, ksize, ksize), dtype)
                           * scale); ki += 1
        params[f"b{i}"] = 0.1 * jax.random.normal(keys[ki], (n_ch,), dtype); ki += 1
    for i in range(1, 4):
        params[f"g{i}"] = 1.0 + 0.1 * jax.random.normal(keys[ki], (n_ch,), dtype); ki += 1
        params[f"bt{i}"] = 0.1 * jax.random.normal(keys[ki], (n_ch,), dtype); ki += 1
    return params


if __name__ == "__main__":
    n_ch, N, H, W = 4, 2, 16, 16
    key = jax.random.PRNGKey(0)
    k_x, k_p = jax.random.split(key)

    # NCHW input, like the PyTorch module: (2, 4, 16, 16)
    x = jax.random.normal(k_x, (N, n_ch, H, W), jnp.float32)
    params = init_params(k_p, n_ch)

    fwd = jax.jit(conv_block_ine_dense)
    out = jax.block_until_ready(fwd(x, params))
    assert out.shape == (N, n_ch, H, W), out.shape
    assert bool(jnp.all(jnp.isfinite(out)))

    # Tight check vs a bf16-matched reference (same MXU-operand rounding),
    # looser sanity check vs the pure-f32 reference (bf16 MXU is intentional).
    ref_match = jax.block_until_ready(_ref_block(x, params, mxu_dtype=jnp.bfloat16))
    ref_f32 = jax.block_until_ready(_ref_block(x, params))
    err_match = float(jnp.max(jnp.abs(out - ref_match)))
    err_f32 = float(jnp.max(jnp.abs(out - ref_f32)))
    assert err_match < 1e-2, f"mismatch vs bf16-matched reference: {err_match}"
    assert err_f32 < 1.5e-1, f"mismatch vs f32 reference: {err_f32}"

    print("KERNEL_OK")
</pallas_src>

<mosaic_0001>
module attributes {stable_mosaic.version = 11 : i64} {
  func.func @_fused_block_kernel(%arg0: i32, %arg1: memref<1x8x256xf32, #tpu.memory_space<vmem>>, %arg2: memref<8x72xbf16, #tpu.memory_space<vmem>>, %arg3: memref<8x144xbf16, #tpu.memory_space<vmem>>, %arg4: memref<8x216xbf16, #tpu.memory_space<vmem>>, %arg5: memref<8x288xbf16, #tpu.memory_space<vmem>>, %arg6: memref<4x8x1xf32, #tpu.memory_space<vmem>>, %arg7: memref<3x8x1xf32, #tpu.memory_space<vmem>>, %arg8: memref<3x8x1xf32, #tpu.memory_space<vmem>>, %arg9: memref<1x8x256xf32, #tpu.memory_space<vmem>>, %arg10: memref<288x256xbf16, #tpu.memory_space<vmem>>) attributes {dimension_semantics = [#tpu.dimension_semantics<parallel>], iteration_bounds = array<i64: 1>, scalar_prefetch = 0 : i64, scratch_operands = 1 : i64, tpu.core_type = #tpu.core_type<tc>, window_params = [{transform_indices = @transform_0, window_bounds = array<i64: 1, 8, 256>}, {pipeline_mode = #tpu.pipeline_mode<synchronous>, transform_indices = @transform_1, window_bounds = array<i64: 8, 72>}, {pipeline_mode = #tpu.pipeline_mode<synchronous>, transform_indices = @transform_2, window_bounds = array<i64: 8, 144>}, {pipeline_mode = #tpu.pipeline_mode<synchronous>, transform_indices = @transform_3, window_bounds = array<i64: 8, 216>}, {pipeline_mode = #tpu.pipeline_mode<synchronous>, transform_indices = @transform_4, window_bounds = array<i64: 8, 288>}, {pipeline_mode = #tpu.pipeline_mode<synchronous>, transform_indices = @transform_5, window_bounds = array<i64: 4, 8, 1>}, {pipeline_mode = #tpu.pipeline_mode<synchronous>, transform_indices = @transform_6, window_bounds = array<i64: 3, 8, 1>}, {pipeline_mode = #tpu.pipeline_mode<synchronous>, transform_indices = @transform_7, window_bounds = array<i64: 3, 8, 1>}, {transform_indices = @transform_8, window_bounds = array<i64: 1, 8, 256>}]} {
    %0 = tpu.iota {dimensions = array<i32: 1>} : vector<8x256xi32>
    %c16_i32 = arith.constant 16 : i32
    %c0_i32 = arith.constant 0 : i32
    %1 = arith.cmpi eq, %c16_i32, %c0_i32 : i32
    %c1_i32 = arith.constant 1 : i32
    %2 = arith.select %1, %c1_i32, %c16_i32 : i32
    %3 = vector.broadcast %2 : i32 to vector<8x256xi32>
    %4 = arith.remsi %0, %3 : vector<8x256xi32>
    %c0_i32_0 = arith.constant 0 : i32
    %5 = vector.broadcast %c0_i32_0 : i32 to vector<8x256xi32>
    %6 = arith.cmpi ne, %4, %5 : vector<8x256xi32>
    %c0_i32_1 = arith.constant 0 : i32
    %7 = vector.broadcast %c0_i32_1 : i32 to vector<8x256xi32>
    %8 = arith.cmpi slt, %4, %7 : vector<8x256xi32>
    %c0_i32_2 = arith.constant 0 : i32
    %9 = arith.cmpi slt, %2, %c0_i32_2 : i32
    %10 = vector.broadcast %9 : i1 to vector<8x256xi1>
    %11 = vector.broadcast %10 : vector<8x256xi1> to vector<8x256xi1>
    %12 = arith.xori %8, %11 : vector<8x256xi1>
    %13 = arith.andi %12, %6 : vector<8x256xi1>
    %14 = vector.broadcast %2 : i32 to vector<8x256xi32>
    %15 = arith.addi %4, %14 : vector<8x256xi32>
    %16 = arith.select %13, %15, %4 : vector<8x256xi1>, vector<8x256xi32>
    %c1_i32_3 = arith.constant 1 : i32
    %17 = vector.broadcast %c1_i32_3 : i32 to vector<8x256xi32>
    %18 = arith.cmpi slt, %16, %17 : vector<8x256xi32>
    %c15_i32 = arith.constant 15 : i32
    %19 = vector.broadcast %c15_i32 : i32 to vector<8x256xi32>
    %20 = arith.cmpi sge, %16, %19 : vector<8x256xi32>
    %c0 = arith.constant 0 : index
    %c0_4 = arith.constant 0 : index
    %c0_5 = arith.constant 0 : index
    %21 = vector.load %arg1[%c0, %c0_4, %c0_5] : memref<1x8x256xf32, #tpu.memory_space<vmem>>, vector<1x8x256xf32>
    %22 = vector.shape_cast %21 : vector<1x8x256xf32> to vector<8x256xf32>
    %c17_i32 = arith.constant 17 : i32
    %23 = tpu.dynamic_rotate %22 by %c17_i32 dim 1 : vector<8x256xf32>, i32 -> vector<8x256xf32>
    %c1_i32_6 = arith.constant 1 : i32
    %24 = tpu.dynamic_rotate %22 by %c1_i32_6 dim 1 : vector<8x256xf32>, i32 -> vector<8x256xf32>
    %25 = arith.select %18, %24, %23 : vector<8x256xi1>, vector<8x256xf32>
    %26 = arith.truncf %25 : vector<8x256xf32> to vector<8x256xbf16>
    %c0_7 = arith.constant 0 : index
    %c0_8 = arith.constant 0 : index
    %27 = vector.load %arg10[%c0_7, %c0_8] : memref<288x256xbf16, #tpu.memory_space<vmem>>, vector<8x256xbf16>
    tpu.vector_store %arg10[%c0_7, %c0_8], %26 {strides = array<i32>} : memref<288x256xbf16, #tpu.memory_space<vmem>>, vector<8x256xbf16>,
    %c16_i32_9 = arith.constant 16 : i32
    %28 = tpu.dynamic_rotate %22 by %c16_i32_9 dim 1 : vector<8x256xf32>, i32 -> vector<8x256xf32>
    %29 = arith.truncf %28 : vector<8x256xf32> to vector<8x256xbf16>
    %c8 = arith.constant 8 : index
    %c0_10 = arith.constant 0 : index
    %30 = vector.load %arg10[%c8, %c0_10] : memref<288x256xbf16, #tpu.memory_space<vmem>>, vector<8x256xbf16>
    tpu.vector_store %arg10[%c8, %c0_10], %29 {strides = array<i32>} : memref<288x256xbf16, #tpu.memory_space<vmem>>, vector<8x256xbf16>,
    %c15_i32_11 = arith.constant 15 : i32
    %31 = tpu.dynamic_rotate %22 by %c15_i32_11 dim 1 : vector<8x256xf32>, i32 -> vector<8x256xf32>
    %c31_i32 = arith.constant 31 : i32
    %32 = tpu.dynamic_rotate %22 by %c31_i32 dim 1 : vector<8x256xf32>, i32 -> vector<8x256xf32>
    %33 = arith.select %20, %32, %31 : vector<8x256xi1>, vector<8x256xf32>
    %34 = arith.truncf %33 : vector<8x256xf32> to vector<8x256xbf16>
    %c16 = arith.constant 16 : index
    %c0_12 = arith.constant 0 : index
    %35 = vector.load %arg10[%c16, %c0_12] : memref<288x256xbf16, #tpu.memory_space<vmem>>, vector<8x256xbf16>
    tpu.vector_store %arg10[%c16, %c0_12], %34 {strides = array<i32>} : memref<288x256xbf16, #tpu.memory_space<vmem>>, vector<8x256xbf16>,
    %c1_i32_13 = arith.constant 1 : i32
    %36 = tpu.dynamic_rotate %22 by %c1_i32_13 dim 1 : vector<8x256xf32>, i32 -> vector<8x256xf32>
    %c241_i32 = arith.constant 241 : i32
    %37 = tpu.dynamic_rotate %22 by %c241_i32 dim 1 : vector<8x256xf32>, i32 -> vector<8x256xf32>
    %38 = arith.select %18, %37, %36 : vector<8x256xi1>, vector<8x256xf32>
    %39 = arith.truncf %38 : vector<8x256xf32> to vector<8x256xbf16>
    %c24 = arith.constant 24 : index
    %c0_14 = arith.constant 0 : index
    %40 = vector.load %arg10[%c24, %c0_14] : memref<288x256xbf16, #tpu.memory_space<vmem>>, vector<8x256xbf16>
    tpu.vector_store %arg10[%c24, %c0_14], %39 {strides = array<i32>} : memref<288x256xbf16, #tpu.memory_space<vmem>>, vector<8x256xbf16>,
    %41 = arith.truncf %22 : vector<8x256xf32> to vector<8x256xbf16>
    %c32 = arith.constant 32 : index
    %c0_15 = arith.constant 0 : index
    %42 = vector.load %arg10[%c32, %c0_15] : memref<288x256xbf16, #tpu.memory_space<vmem>>, vector<8x256xbf16>
    tpu.vector_store %arg10[%c32, %c0_15], %41 {strides = array<i32>} : memref<288x256xbf16, #tpu.memory_space<vmem>>, vector<8x256xbf16>,
    %c255_i32 = arith.constant 255 : i32
    %43 = tpu.dynamic_rotate %22 by %c255_i32 dim 1 : vector<8x256xf32>, i32 -> vector<8x256xf32>
    %c15_i32_16 = arith.constant 15 : i32
    %44 = tpu.dynamic_rotate %22 by %c15_i32_16 dim 1 : vector<8x256xf32>, i32 -> vector<8x256xf32>
    %45 = arith.select %20, %44, %43 : vector<8x256xi1>, vector<8x256xf32>
    %46 = arith.truncf %45 : vector<8x256xf32> to vector<8x256xbf16>
    %c40 = arith.constant 40 : index
    %c0_17 = arith.constant 0 : index
    %47 = vector.load %arg10[%c40, %c0_17] : memref<288x256xbf16, #tpu.memory_space<vmem>>, vector<8x256xbf16>
    tpu.vector_store %arg10[%c40, %c0_17], %46 {strides = array<i32>} : memref<288x256xbf16, #tpu.memory_space<vmem>>, vector<8x256xbf16>,
    %c241_i32_18 = arith.constant 241 : i32
    %48 = tpu.dynamic_rotate %22 by %c241_i32_18 dim 1 : vector<8x256xf32>, i32 -> vector<8x256xf32>
    %c225_i32 = arith.constant 225 : i32
    %49 = tpu.dynamic_rotate %22 by %c225_i32 dim 1 : vector<8x256xf32>, i32 -> vector<8x256xf32>
    %50 = arith.select %18, %49, %48 : vector<8x256xi1>, vector<8x256xf32>
    %51 = arith.truncf %50 : vector<8x256xf32> to vector<8x256xbf16>
    %c48 = arith.constant 48 : index
    %c0_19 = arith.constant 0 : index
    %52 = vector.load %arg10[%c48, %c0_19] : memref<288x256xbf16, #tpu.memory_space<vmem>>, vector<8x256xbf16>
    tpu.vector_store %arg10[%c48, %c0_19], %51 {strides = array<i32>} : memref<288x256xbf16, #tpu.memory_space<vmem>>, vector<8x256xbf16>,
    %c240_i32 = arith.constant 240 : i32
    %53 = tpu.dynamic_rotate %22 by %c240_i32 dim 1 : vector<8x256xf32>, i32 -> vector<8x256xf32>
    %54 = arith.truncf %53 : vector<8x256xf32> to vector<8x256xbf16>
    %c56 = arith.constant 56 : index
    %c0_20 = arith.constant 0 : index
    %55 = vector.load %arg10[%c56, %c0_20] : memref<288x256xbf16, #tpu.memory_space<vmem>>, vector<8x256xbf16>
    tpu.vector_store %arg10[%c56, %c0_20], %54 {strides = array<i32>} : memref<288x256xbf16, #tpu.memory_space<vmem>>, vector<8x256xbf16>,
    %c239_i32 = arith.constant 239 : i32
    %56 = tpu.dynamic_rotate %22 by %c239_i32 dim 1 : vector<8x256xf32>, i32 -> vector<8x256xf32>
    %c255_i32_21 = arith.constant 255 : i32
    %57 = tpu.dynamic_rotate %22 by %c255_i32_21 dim 1 : vector<8x256xf32>, i32 -> vector<8x256xf32>
    %58 = arith.select %20, %57, %56 : vector<8x256xi1>, vector<8x256xf32>
    %59 = arith.truncf %58 : vector<8x256xf32> to vector<8x256xbf16>
    %c64 = arith.constant 64 : index
    %c0_22 = arith.constant 0 : index
    %60 = vector.load %arg10[%c64, %c0_22] : memref<288x256xbf16, #tpu.memory_space<vmem>>, vector<8x256xbf16>
    tpu.vector_store %arg10[%c64, %c0_22], %59 {strides = array<i32>} : memref<288x256xbf16, #tpu.memory_space<vmem>>, vector<8x256xbf16>,
    %c0_23 = arith.constant 0 : index
    %c0_24 = arith.constant 0 : index
    %61 = vector.load %arg2[%c0_23, %c0_24] : memref<8x72xbf16, #tpu.memory_space<vmem>>, vector<8x72xbf16>
    %c0_25 = arith.constant 0 : index
    %c0_26 = arith.constant 0 : index
    %62 = vector.load %arg10[%c0_25, %c0_26] : memref<288x256xbf16, #tpu.memory_space<vmem>>, vector<72x256xbf16>
    %cst = arith.constant dense<0.000000e+00> : vector<8x256xf32>
    %63 = tpu.matmul %61, %62, %cst {dimension_numbers = #tpu.dot_dimension_numbers<[1], [0], [0], [1], [0, 0, 1, 1], [], []>} : vector<8x72xbf16>, vector<72x256xbf16>, vector<8x256xf32> -> vector<8x256xf32>
    %c0_27 = arith.constant 0 : index
    %c0_28 = arith.constant 0 : index
    %c0_29 = arith.constant 0 : index
    %64 = vector.load %arg6[%c0_27, %c0_28, %c0_29] : memref<4x8x1xf32, #tpu.memory_space<vmem>>, vector<1x8x1xf32>
    %65 = vector.shape_cast %64 : vector<1x8x1xf32> to vector<8x1xf32>
    %66 = vector.broadcast %65 : vector<8x1xf32> to vector<8x256xf32>
    %67 = arith.addf %63, %66 : vector<8x256xf32>
    %cst_30 = arith.constant 0.000000e+00 : f32
    %68 = vector.broadcast %cst_30 : f32 to vector<8x256xf32>
    %69 = arith.maximumf %67, %68 : vector<8x256xf32>
    %cst_31 = arith.constant dense<0.000000e+00> : vector<8xf32>
    %70 = vector.multi_reduction <add>, %69, %cst_31 [1] : vector<8x256xf32> to vector<8xf32>
    %71 = vector.shape_cast %70 : vector<8xf32> to vector<8x1xf32>
    %72 = arith.mulf %69, %69 : vector<8x256xf32>
    %cst_32 = arith.constant dense<0.000000e+00> : vector<8xf32>
    %73 = vector.multi_reduction <add>, %72, %cst_32 [1] : vector<8x256xf32> to vector<8xf32>
    %74 = vector.shape_cast %73 : vector<8xf32> to vector<8x1xf32>
    %cst_33 = arith.constant 3.906250e-03 : f32
    %75 = vector.broadcast %cst_33 : f32 to vector<8x1xf32>
    %76 = arith.mulf %71, %75 : vector<8x1xf32>
    %cst_34 = arith.constant 3.906250e-03 : f32
    %77 = vector.broadcast %cst_34 : f32 to vector<8x1xf32>
    %78 = arith.mulf %74, %77 : vector<8x1xf32>
    %79 = arith.mulf %76, %76 : vector<8x1xf32>
    %80 = arith.subf %78, %79 : vector<8x1xf32>
    %cst_35 = arith.constant 0.000000e+00 : f32
    %81 = vector.broadcast %cst_35 : f32 to vector<8x1xf32>
    %82 = arith.maximumf %80, %81 : vector<8x1xf32>
    %cst_36 = arith.constant 9.99999974E-6 : f32
    %83 = vector.broadcast %cst_36 : f32 to vector<8x1xf32>
    %84 = arith.addf %82, %83 : vector<8x1xf32>
    %85 = math.rsqrt %84 : vector<8x1xf32>
    %c0_37 = arith.constant 0 : index
    %c0_38 = arith.constant 0 : index
    %c0_39 = arith.constant 0 : index
    %86 = vector.load %arg7[%c0_37, %c0_38, %c0_39] : memref<3x8x1xf32, #tpu.memory_space<vmem>>, vector<1x8x1xf32>
    %87 = vector.shape_cast %86 : vector<1x8x1xf32> to vector<8x1xf32>
    %88 = arith.mulf %85, %87 : vector<8x1xf32>
    %89 = vector.broadcast %88 : vector<8x1xf32> to vector<8x256xf32>
    %90 = arith.mulf %69, %89 : vector<8x256xf32>
    %c0_40 = arith.constant 0 : index
    %c0_41 = arith.constant 0 : index
    %c0_42 = arith.constant 0 : index
    %91 = vector.load %arg8[%c0_40, %c0_41, %c0_42] : memref<3x8x1xf32, #tpu.memory_space<vmem>>, vector<1x8x1xf32>
    %92 = vector.shape_cast %91 : vector<1x8x1xf32> to vector<8x1xf32>
    %93 = arith.mulf %76, %88 : vector<8x1xf32>
    %94 = arith.subf %92, %93 : vector<8x1xf32>
    %95 = vector.broadcast %94 : vector<8x1xf32> to vector<8x256xf32>
    %96 = arith.addf %90, %95 : vector<8x256xf32>
    %c17_i32_43 = arith.constant 17 : i32
    %97 = tpu.dynamic_rotate %96 by %c17_i32_43 dim 1 : vector<8x256xf32>, i32 -> vector<8x256xf32>
    %c1_i32_44 = arith.constant 1 : i32
    %98 = tpu.dynamic_rotate %96 by %c1_i32_44 dim 1 : vector<8x256xf32>, i32 -> vector<8x256xf32>
    %99 = arith.select %18, %98, %97 : vector<8x256xi1>, vector<8x256xf32>
    %100 = arith.truncf %99 : vector<8x256xf32> to vector<8x256xbf16>
    %c72 = arith.constant 72 : index
    %c0_45 = arith.constant 0 : index
    %101 = vector.load %arg10[%c72, %c0_45] : memref<288x256xbf16, #tpu.memory_space<vmem>>, vector<8x256xbf16>
    tpu.vector_store %arg10[%c72, %c0_45], %100 {strides = array<i32>} : memref<288x256xbf16, #tpu.memory_space<vmem>>, vector<8x256xbf16>,
    %c16_i32_46 = arith.constant 16 : i32
    %102 = tpu.dynamic_rotate %96 by %c16_i32_46 dim 1 : vector<8x256xf32>, i32 -> vector<8x256xf32>
    %103 = arith.truncf %102 : vector<8x256xf32> to vector<8x256xbf16>
    %c80 = arith.constant 80 : index
    %c0_47 = arith.constant 0 : index
    %104 = vector.load %arg10[%c80, %c0_47] : memref<288x256xbf16, #tpu.memory_space<vmem>>, vector<8x256xbf16>
    tpu.vector_store %arg10[%c80, %c0_47], %103 {strides = array<i32>} : memref<288x256xbf16, #tpu.memory_space<vmem>>, vector<8x256xbf16>,
    %c15_i32_48 = arith.constant 15 : i32
    %105 = tpu.dynamic_rotate %96 by %c15_i32_48 dim 1 : vector<8x256xf32>, i32 -> vector<8x256xf32>
    %c31_i32_49 = arith.constant 31 : i32
    %106 = tpu.dynamic_rotate %96 by %c31_i32_49 dim 1 : vector<8x256xf32>, i32 -> vector<8x256xf32>
    %107 = arith.select %20, %106, %105 : vector<8x256xi1>, vector<8x256xf32>
    %108 = arith.truncf %107 : vector<8x256xf32> to vector<8x256xbf16>
    %c88 = arith.constant 88 : index
    %c0_50 = arith.constant 0 : index
    %109 = vector.load %arg10[%c88, %c0_50] : memref<288x256xbf16, #tpu.memory_space<vmem>>, vector<8x256xbf16>
    tpu.vector_store %arg10[%c88, %c0_50], %108 {strides = array<i32>} : memref<288x256xbf16, #tpu.memory_space<vmem>>, vector<8x256xbf16>,
    %c1_i32_51 = arith.constant 1 : i32
    %110 = tpu.dynamic_rotate %96 by %c1_i32_51 dim 1 : vector<8x256xf32>, i32 -> vector<8x256xf32>
    %c241_i32_52 = arith.constant 241 : i32
    %111 = tpu.dynamic_rotate %96 by %c241_i32_52 dim 1 : vector<8x256xf32>, i32 -> vector<8x256xf32>
    %112 = arith.select %18, %111, %110 : vector<8x256xi1>, vector<8x256xf32>
    %113 = arith.truncf %112 : vector<8x256xf32> to vector<8x256xbf16>
    %c96 = arith.constant 96 : index
    %c0_53 = arith.constant 0 : index
    %114 = vector.load %arg10[%c96, %c0_53] : memref<288x256xbf16, #tpu.memory_space<vmem>>, vector<8x256xbf16>
    tpu.vector_store %arg10[%c96, %c0_53], %113 {strides = array<i32>} : memref<288x256xbf16, #tpu.memory_space<vmem>>, vector<8x256xbf16>,
    %115 = arith.truncf %96 : vector<8x256xf32> to vector<8x256xbf16>
    %c104 = arith.constant 104 : index
    %c0_54 = arith.constant 0 : index
    %116 = vector.load %arg10[%c104, %c0_54] : memref<288x256xbf16, #tpu.memory_space<vmem>>, vector<8x256xbf16>
    tpu.vector_store %arg10[%c104, %c0_54], %115 {strides = array<i32>} : memref<288x256xbf16, #tpu.memory_space<vmem>>, vector<8x256xbf16>,
    %c255_i32_55 = arith.constant 255 : i32
    %117 = tpu.dynamic_rotate %96 by %c255_i32_55 dim 1 : vector<8x256xf32>, i32 -> vector<8x256xf32>
    %c15_i32_56 = arith.constant 15 : i32
    %118 = tpu.dynamic_rotate %96 by %c15_i32_56 dim 1 : vector<8x256xf32>, i32 -> vector<8x256xf32>
    %119 = arith.select %20, %118, %117 : vector<8x256xi1>, vector<8x256xf32>
    %120 = arith.truncf %119 : vector<8x256xf32> to vector<8x256xbf16>
    %c112 = arith.constant 112 : index
    %c0_57 = arith.constant 0 : index
    %121 = vector.load %arg10[%c112, %c0_57] : memref<288x256xbf16, #tpu.memory_space<vmem>>, vector<8x256xbf16>
    tpu.vector_store %arg10[%c112, %c0_57], %120 {strides = array<i32>} : memref<288x256xbf16, #tpu.memory_space<vmem>>, vector<8x256xbf16>,
    %c241_i32_58 = arith.constant 241 : i32
    %122 = tpu.dynamic_rotate %96 by %c241_i32_58 dim 1 : vector<8x256xf32>, i32 -> vector<8x256xf32>
    %c225_i32_59 = arith.constant 225 : i32
    %123 = tpu.dynamic_rotate %96 by %c225_i32_59 dim 1 : vector<8x256xf32>, i32 -> vector<8x256xf32>
    %124 = arith.select %18, %123, %122 : vector<8x256xi1>, vector<8x256xf32>
    %125 = arith.truncf %124 : vector<8x256xf32> to vector<8x256xbf16>
    %c120 = arith.constant 120 : index
    %c0_60 = arith.constant 0 : index
    %126 = vector.load %arg10[%c120, %c0_60] : memref<288x256xbf16, #tpu.memory_space<vmem>>, vector<8x256xbf16>
    tpu.vector_store %arg10[%c120, %c0_60], %125 {strides = array<i32>} : memref<288x256xbf16, #tpu.memory_space<vmem>>, vector<8x256xbf16>,
    %c240_i32_61 = arith.constant 240 : i32
    %127 = tpu.dynamic_rotate %96 by %c240_i32_61 dim 1 : vector<8x256xf32>, i32 -> vector<8x256xf32>
    %128 = arith.truncf %127 : vector<8x256xf32> to vector<8x256xbf16>
    %c128 = arith.constant 128 : index
    %c0_62 = arith.constant 0 : index
    %129 = vector.load %arg10[%c128, %c0_62] : memref<288x256xbf16, #tpu.memory_space<vmem>>, vector<8x256xbf16>
    tpu.vector_store %arg10[%c128, %c0_62], %128 {strides = array<i32>} : memref<288x256xbf16, #tpu.memory_space<vmem>>, vector<8x256xbf16>,
    %c239_i32_63 = arith.constant 239 : i32
    %130 = tpu.dynamic_rotate %96 by %c239_i32_63 dim 1 : vector<8x256xf32>, i32 -> vector<8x256xf32>
    %c255_i32_64 = arith.constant 255 : i32
    %131 = tpu.dynamic_rotate %96 by %c255_i32_64 dim 1 : vector<8x256xf32>, i32 -> vector<8x256xf32>
    %132 = arith.select %20, %131, %130 : vector<8x256xi1>, vector<8x256xf32>
    %133 = arith.truncf %132 : vector<8x256xf32> to vector<8x256xbf16>
    %c136 = arith.constant 136 : index
    %c0_65 = arith.constant 0 : index
    %134 = vector.load %arg10[%c136, %c0_65] : memref<288x256xbf16, #tpu.memory_space<vmem>>, vector<8x256xbf16>
    tpu.vector_store %arg10[%c136, %c0_65], %133 {strides = array<i32>} : memref<288x256xbf16, #tpu.memory_space<vmem>>, vector<8x256xbf16>,
    %c0_66 = arith.constant 0 : index
    %c0_67 = arith.constant 0 : index
    %135 = vector.load %arg3[%c0_66, %c0_67] : memref<8x144xbf16, #tpu.memory_space<vmem>>, vector<8x144xbf16>
    %c0_68 = arith.constant 0 : index
    %c0_69 = arith.constant 0 : index
    %136 = vector.load %arg10[%c0_68, %c0_69] : memref<288x256xbf16, #tpu.memory_space<vmem>>, vector<144x256xbf16>
    %cst_70 = arith.constant dense<0.000000e+00> : vector<8x256xf32>
    %137 = tpu.matmul %135, %136, %cst_70 {dimension_numbers = #tpu.dot_dimension_numbers<[1], [0], [0], [1], [0, 0, 1, 1], [], []>} : vector<8x144xbf16>, vector<144x256xbf16>, vector<8x256xf32> -> vector<8x256xf32>
    %c1 = arith.constant 1 : index
    %c0_71 = arith.constant 0 : index
    %c0_72 = arith.constant 0 : index
    %138 = vector.load %arg6[%c1, %c0_71, %c0_72] : memref<4x8x1xf32, #tpu.memory_space<vmem>>, vector<1x8x1xf32>
    %139 = vector.shape_cast %138 : vector<1x8x1xf32> to vector<8x1xf32>
    %140 = vector.broadcast %139 : vector<8x1xf32> to vector<8x256xf32>
    %141 = arith.addf %137, %140 : vector<8x256xf32>
    %cst_73 = arith.constant 0.000000e+00 : f32
    %142 = vector.broadcast %cst_73 : f32 to vector<8x256xf32>
    %143 = arith.maximumf %141, %142 : vector<8x256xf32>
    %cst_74 = arith.constant dense<0.000000e+00> : vector<8xf32>
    %144 = vector.multi_reduction <add>, %143, %cst_74 [1] : vector<8x256xf32> to vector<8xf32>
    %145 = vector.shape_cast %144 : vector<8xf32> to vector<8x1xf32>
    %146 = arith.mulf %143, %143 : vector<8x256xf32>
    %cst_75 = arith.constant dense<0.000000e+00> : vector<8xf32>
    %147 = vector.multi_reduction <add>, %146, %cst_75 [1] : vector<8x256xf32> to vector<8xf32>
    %148 = vector.shape_cast %147 : vector<8xf32> to vector<8x1xf32>
    %cst_76 = arith.constant 3.906250e-03 : f32
    %149 = vector.broadcast %cst_76 : f32 to vector<8x1xf32>
    %150 = arith.mulf %145, %149 : vector<8x1xf32>
    %cst_77 = arith.constant 3.906250e-03 : f32
    %151 = vector.broadcast %cst_77 : f32 to vector<8x1xf32>
    %152 = arith.mulf %148, %151 : vector<8x1xf32>
    %153 = arith.mulf %150, %150 : vector<8x1xf32>
    %154 = arith.subf %152, %153 : vector<8x1xf32>
    %cst_78 = arith.constant 0.000000e+00 : f32
    %155 = vector.broadcast %cst_78 : f32 to vector<8x1xf32>
    %156 = arith.maximumf %154, %155 : vector<8x1xf32>
    %cst_79 = arith.constant 9.99999974E-6 : f32
    %157 = vector.broadcast %cst_79 : f32 to vector<8x1xf32>
    %158 = arith.addf %156, %157 : vector<8x1xf32>
    %159 = math.rsqrt %158 : vector<8x1xf32>
    %c1_80 = arith.constant 1 : index
    %c0_81 = arith.constant 0 : index
    %c0_82 = arith.constant 0 : index
    %160 = vector.load %arg7[%c1_80, %c0_81, %c0_82] : memref<3x8x1xf32, #tpu.memory_space<vmem>>, vector<1x8x1xf32>
    %161 = vector.shape_cast %160 : vector<1x8x1xf32> to vector<8x1xf32>
    %162 = arith.mulf %159, %161 : vector<8x1xf32>
    %163 = vector.broadcast %162 : vector<8x1xf32> to vector<8x256xf32>
    %164 = arith.mulf %143, %163 : vector<8x256xf32>
    %c1_83 = arith.constant 1 : index
    %c0_84 = arith.constant 0 : index
    %c0_85 = arith.constant 0 : index
    %165 = vector.load %arg8[%c1_83, %c0_84, %c0_85] : memref<3x8x1xf32, #tpu.memory_space<vmem>>, vector<1x8x1xf32>
    %166 = vector.shape_cast %165 : vector<1x8x1xf32> to vector<8x1xf32>
    %167 = arith.mulf %150, %162 : vector<8x1xf32>
    %168 = arith.subf %166, %167 : vector<8x1xf32>
    %169 = vector.broadcast %168 : vector<8x1xf32> to vector<8x256xf32>
    %170 = arith.addf %164, %169 : vector<8x256xf32>
    %c17_i32_86 = arith.constant 17 : i32
    %171 = tpu.dynamic_rotate %170 by %c17_i32_86 dim 1 : vector<8x256xf32>, i32 -> vector<8x256xf32>
    %c1_i32_87 = arith.constant 1 : i32
    %172 = tpu.dynamic_rotate %170 by %c1_i32_87 dim 1 : vector<8x256xf32>, i32 -> vector<8x256xf32>
    %173 = arith.select %18, %172, %171 : vector<8x256xi1>, vector<8x256xf32>
    %174 = arith.truncf %173 : vector<8x256xf32> to vector<8x256xbf16>
    %c144 = arith.constant 144 : index
    %c0_88 = arith.constant 0 : index
    %175 = vector.load %arg10[%c144, %c0_88] : memref<288x256xbf16, #tpu.memory_space<vmem>>, vector<8x256xbf16>
    tpu.vector_store %arg10[%c144, %c0_88], %174 {strides = array<i32>} : memref<288x256xbf16, #tpu.memory_space<vmem>>, vector<8x256xbf16>,
    %c16_i32_89 = arith.constant 16 : i32
    %176 = tpu.dynamic_rotate %170 by %c16_i32_89 dim 1 : vector<8x256xf32>, i32 -> vector<8x256xf32>
    %177 = arith.truncf %176 : vector<8x256xf32> to vector<8x256xbf16>
    %c152 = arith.constant 152 : index
    %c0_90 = arith.constant 0 : index
    %178 = vector.load %arg10[%c152, %c0_90] : memref<288x256xbf16, #tpu.memory_space<vmem>>, vector<8x256xbf16>
    tpu.vector_store %arg10[%c152, %c0_90], %177 {strides = array<i32>} : memref<288x256xbf16, #tpu.memory_space<vmem>>, vector<8x256xbf16>,
    %c15_i32_91 = arith.constant 15 : i32
    %179 = tpu.dynamic_rotate %170 by %c15_i32_91 dim 1 : vector<8x256xf32>, i32 -> vector<8x256xf32>
    %c31_i32_92 = arith.constant 31 : i32
    %180 = tpu.dynamic_rotate %170 by %c31_i32_92 dim 1 : vector<8x256xf32>, i32 -> vector<8x256xf32>
    %181 = arith.select %20, %180, %179 : vector<8x256xi1>, vector<8x256xf32>
    %182 = arith.truncf %181 : vector<8x256xf32> to vector<8x256xbf16>
    %c160 = arith.constant 160 : index
    %c0_93 = arith.constant 0 : index
    %183 = vector.load %arg10[%c160, %c0_93] : memref<288x256xbf16, #tpu.memory_space<vmem>>, vector<8x256xbf16>
    tpu.vector_store %arg10[%c160, %c0_93], %182 {strides = array<i32>} : memref<288x256xbf16, #tpu.memory_space<vmem>>, vector<8x256xbf16>,
    %c1_i32_94 = arith.constant 1 : i32
    %184 = tpu.dynamic_rotate %170 by %c1_i32_94 dim 1 : vector<8x256xf32>, i32 -> vector<8x256xf32>
    %c241_i32_95 = arith.constant 241 : i32
    %185 = tpu.dynamic_rotate %170 by %c241_i32_95 dim 1 : vector<8x256xf32>, i32 -> vector<8x256xf32>
    %186 = arith.select %18, %185, %184 : vector<8x256xi1>, vector<8x256xf32>
    %187 = arith.truncf %186 : vector<8x256xf32> to vector<8x256xbf16>
    %c168 = arith.constant 168 : index
    %c0_96 = arith.constant 0 : index
    %188 = vector.load %arg10[%c168, %c0_96] : memref<288x256xbf16, #tpu.memory_space<vmem>>, vector<8x256xbf16>
    tpu.vector_store %arg10[%c168, %c0_96], %187 {strides = array<i32>} : memref<288x256xbf16, #tpu.memory_space<vmem>>, vector<8x256xbf16>,
    %189 = arith.truncf %170 : vector<8x256xf32> to vector<8x256xbf16>
    %c176 = arith.constant 176 : index
    %c0_97 = arith.constant 0 : index
    %190 = vector.load %arg10[%c176, %c0_97] : memref<288x256xbf16, #tpu.memory_space<vmem>>, vector<8x256xbf16>
    tpu.vector_store %arg10[%c176, %c0_97], %189 {strides = array<i32>} : memref<288x256xbf16, #tpu.memory_space<vmem>>, vector<8x256xbf16>,
    %c255_i32_98 = arith.constant 255 : i32
    %191 = tpu.dynamic_rotate %170 by %c255_i32_98 dim 1 : vector<8x256xf32>, i32 -> vector<8x256xf32>
    %c15_i32_99 = arith.constant 15 : i32
    %192 = tpu.dynamic_rotate %170 by %c15_i32_99 dim 1 : vector<8x256xf32>, i32 -> vector<8x256xf32>
    %193 = arith.select %20, %192, %191 : vector<8x256xi1>, vector<8x256xf32>
    %194 = arith.truncf %193 : vector<8x256xf32> to vector<8x256xbf16>
    %c184 = arith.constant 184 : index
    %c0_100 = arith.constant 0 : index
    %195 = vector.load %arg10[%c184, %c0_100] : memref<288x256xbf16, #tpu.memory_space<vmem>>, vector<8x256xbf16>
    tpu.vector_store %arg10[%c184, %c0_100], %194 {strides = array<i32>} : memref<288x256xbf16, #tpu.memory_space<vmem>>, vector<8x256xbf16>,
    %c241_i32_101 = arith.constant 241 : i32
    %196 = tpu.dynamic_rotate %170 by %c241_i32_101 dim 1 : vector<8x256xf32>, i32 -> vector<8x256xf32>
    %c225_i32_102 = arith.constant 225 : i32
    %197 = tpu.dynamic_rotate %170 by %c225_i32_102 dim 1 : vector<8x256xf32>, i32 -> vector<8x256xf32>
    %198 = arith.select %18, %197, %196 : vector<8x256xi1>, vector<8x256xf32>
    %199 = arith.truncf %198 : vector<8x256xf32> to vector<8x256xbf16>
    %c192 = arith.constant 192 : index
    %c0_103 = arith.constant 0 : index
    %200 = vector.load %arg10[%c192, %c0_103] : memref<288x256xbf16, #tpu.memory_space<vmem>>, vector<8x256xbf16>
    tpu.vector_store %arg10[%c192, %c0_103], %199 {strides = array<i32>} : memref<288x256xbf16, #tpu.memory_space<vmem>>, vector<8x256xbf16>,
    %c240_i32_104 = arith.constant 240 : i32
    %201 = tpu.dynamic_rotate %170 by %c240_i32_104 dim 1 : vector<8x256xf32>, i32 -> vector<8x256xf32>
    %202 = arith.truncf %201 : vector<8x256xf32> to vector<8x256xbf16>
    %c200 = arith.constant 200 : index
    %c0_105 = arith.constant 0 : index
    %203 = vector.load %arg10[%c200, %c0_105] : memref<288x256xbf16, #tpu.memory_space<vmem>>, vector<8x256xbf16>
    tpu.vector_store %arg10[%c200, %c0_105], %202 {strides = array<i32>} : memref<288x256xbf16, #tpu.memory_space<vmem>>, vector<8x256xbf16>,
    %c239_i32_106 = arith.constant 239 : i32
    %204 = tpu.dynamic_rotate %170 by %c239_i32_106 dim 1 : vector<8x256xf32>, i32 -> vector<8x256xf32>
    %c255_i32_107 = arith.constant 255 : i32
    %205 = tpu.dynamic_rotate %170 by %c255_i32_107 dim 1 : vector<8x256xf32>, i32 -> vector<8x256xf32>
    %206 = arith.select %20, %205, %204 : vector<8x256xi1>, vector<8x256xf32>
    %207 = arith.truncf %206 : vector<8x256xf32> to vector<8x256xbf16>
    %c208 = arith.constant 208 : index
    %c0_108 = arith.constant 0 : index
    %208 = vector.load %arg10[%c208, %c0_108] : memref<288x256xbf16, #tpu.memory_space<vmem>>, vector<8x256xbf16>
    tpu.vector_store %arg10[%c208, %c0_108], %207 {strides = array<i32>} : memref<288x256xbf16, #tpu.memory_space<vmem>>, vector<8x256xbf16>,
    %c0_109 = arith.constant 0 : index
    %c0_110 = arith.constant 0 : index
    %209 = vector.load %arg4[%c0_109, %c0_110] : memref<8x216xbf16, #tpu.memory_space<vmem>>, vector<8x216xbf16>
    %c0_111 = arith.constant 0 : index
    %c0_112 = arith.constant 0 : index
    %210 = vector.load %arg10[%c0_111, %c0_112] : memref<288x256xbf16, #tpu.memory_space<vmem>>, vector<216x256xbf16>
    %cst_113 = arith.constant dense<0.000000e+00> : vector<8x256xf32>
    %211 = tpu.matmul %209, %210, %cst_113 {dimension_numbers = #tpu.dot_dimension_numbers<[1], [0], [0], [1], [0, 0, 1, 1], [], []>} : vector<8x216xbf16>, vector<216x256xbf16>, vector<8x256xf32> -> vector<8x256xf32>
    %c2 = arith.constant 2 : index
    %c0_114 = arith.constant 0 : index
    %c0_115 = arith.constant 0 : index
    %212 = vector.load %arg6[%c2, %c0_114, %c0_115] : memref<4x8x1xf32, #tpu.memory_space<vmem>>, vector<1x8x1xf32>
    %213 = vector.shape_cast %212 : vector<1x8x1xf32> to vector<8x1xf32>
    %214 = vector.broadcast %213 : vector<8x1xf32> to vector<8x256xf32>
    %215 = arith.addf %211, %214 : vector<8x256xf32>
    %cst_116 = arith.constant 0.000000e+00 : f32
    %216 = vector.broadcast %cst_116 : f32 to vector<8x256xf32>
    %217 = arith.maximumf %215, %216 : vector<8x256xf32>
    %cst_117 = arith.constant dense<0.000000e+00> : vector<8xf32>
    %218 = vector.multi_reduction <add>, %217, %cst_117 [1] : vector<8x256xf32> to vector<8xf32>
    %219 = vector.shape_cast %218 : vector<8xf32> to vector<8x1xf32>
    %220 = arith.mulf %217, %217 : vector<8x256xf32>
    %cst_118 = arith.constant dense<0.000000e+00> : vector<8xf32>
    %221 = vector.multi_reduction <add>, %220, %cst_118 [1] : vector<8x256xf32> to vector<8xf32>
    %222 = vector.shape_cast %221 : vector<8xf32> to vector<8x1xf32>
    %cst_119 = arith.constant 3.906250e-03 : f32
    %223 = vector.broadcast %cst_119 : f32 to vector<8x1xf32>
    %224 = arith.mulf %219, %223 : vector<8x1xf32>
    %cst_120 = arith.constant 3.906250e-03 : f32
    %225 = vector.broadcast %cst_120 : f32 to vector<8x1xf32>
    %226 = arith.mulf %222, %225 : vector<8x1xf32>
    %227 = arith.mulf %224, %224 : vector<8x1xf32>
    %228 = arith.subf %226, %227 : vector<8x1xf32>
    %cst_121 = arith.constant 0.000000e+00 : f32
    %229 = vector.broadcast %cst_121 : f32 to vector<8x1xf32>
    %230 = arith.maximumf %228, %229 : vector<8x1xf32>
    %cst_122 = arith.constant 9.99999974E-6 : f32
    %231 = vector.broadcast %cst_122 : f32 to vector<8x1xf32>
    %232 = arith.addf %230, %231 : vector<8x1xf32>
    %233 = math.rsqrt %232 : vector<8x1xf32>
    %c2_123 = arith.constant 2 : index
    %c0_124 = arith.constant 0 : index
    %c0_125 = arith.constant 0 : index
    %234 = vector.load %arg7[%c2_123, %c0_124, %c0_125] : memref<3x8x1xf32, #tpu.memory_space<vmem>>, vector<1x8x1xf32>
    %235 = vector.shape_cast %234 : vector<1x8x1xf32> to vector<8x1xf32>
    %236 = arith.mulf %233, %235 : vector<8x1xf32>
    %237 = vector.broadcast %236 : vector<8x1xf32> to vector<8x256xf32>
    %238 = arith.mulf %217, %237 : vector<8x256xf32>
    %c2_126 = arith.constant 2 : index
    %c0_127 = arith.constant 0 : index
    %c0_128 = arith.constant 0 : index
    %239 = vector.load %arg8[%c2_126, %c0_127, %c0_128] : memref<3x8x1xf32, #tpu.memory_space<vmem>>, vector<1x8x1xf32>
    %240 = vector.shape_cast %239 : vector<1x8x1xf32> to vector<8x1xf32>
    %241 = arith.mulf %224, %236 : vector<8x1xf32>
    %242 = arith.subf %240, %241 : vector<8x1xf32>
    %243 = vector.broadcast %242 : vector<8x1xf32> to vector<8x256xf32>
    %244 = arith.addf %238, %243 : vector<8x256xf32>
    %c17_i32_129 = arith.constant 17 : i32
    %245 = tpu.dynamic_rotate %244 by %c17_i32_129 dim 1 : vector<8x256xf32>, i32 -> vector<8x256xf32>
    %c1_i32_130 = arith.constant 1 : i32
    %246 = tpu.dynamic_rotate %244 by %c1_i32_130 dim 1 : vector<8x256xf32>, i32 -> vector<8x256xf32>
    %247 = arith.select %18, %246, %245 : vector<8x256xi1>, vector<8x256xf32>
    %248 = arith.truncf %247 : vector<8x256xf32> to vector<8x256xbf16>
    %c216 = arith.constant 216 : index
    %c0_131 = arith.constant 0 : index
    %249 = vector.load %arg10[%c216, %c0_131] : memref<288x256xbf16, #tpu.memory_space<vmem>>, vector<8x256xbf16>
    tpu.vector_store %arg10[%c216, %c0_131], %248 {strides = array<i32>} : memref<288x256xbf16, #tpu.memory_space<vmem>>, vector<8x256xbf16>,
    %c16_i32_132 = arith.constant 16 : i32
    %250 = tpu.dynamic_rotate %244 by %c16_i32_132 dim 1 : vector<8x256xf32>, i32 -> vector<8x256xf32>
    %251 = arith.truncf %250 : vector<8x256xf32> to vector<8x256xbf16>
    %c224 = arith.constant 224 : index
    %c0_133 = arith.constant 0 : index
    %252 = vector.load %arg10[%c224, %c0_133] : memref<288x256xbf16, #tpu.memory_space<vmem>>, vector<8x256xbf16>
    tpu.vector_store %arg10[%c224, %c0_133], %251 {strides = array<i32>} : memref<288x256xbf16, #tpu.memory_space<vmem>>, vector<8x256xbf16>,
    %c15_i32_134 = arith.constant 15 : i32
    %253 = tpu.dynamic_rotate %244 by %c15_i32_134 dim 1 : vector<8x256xf32>, i32 -> vector<8x256xf32>
    %c31_i32_135 = arith.constant 31 : i32
    %254 = tpu.dynamic_rotate %244 by %c31_i32_135 dim 1 : vector<8x256xf32>, i32 -> vector<8x256xf32>
    %255 = arith.select %20, %254, %253 : vector<8x256xi1>, vector<8x256xf32>
    %256 = arith.truncf %255 : vector<8x256xf32> to vector<8x256xbf16>
    %c232 = arith.constant 232 : index
    %c0_136 = arith.constant 0 : index
    %257 = vector.load %arg10[%c232, %c0_136] : memref<288x256xbf16, #tpu.memory_space<vmem>>, vector<8x256xbf16>
    tpu.vector_store %arg10[%c232, %c0_136], %256 {strides = array<i32>} : memref<288x256xbf16, #tpu.memory_space<vmem>>, vector<8x256xbf16>,
    %c1_i32_137 = arith.constant 1 : i32
    %258 = tpu.dynamic_rotate %244 by %c1_i32_137 dim 1 : vector<8x256xf32>, i32 -> vector<8x256xf32>
    %c241_i32_138 = arith.constant 241 : i32
    %259 = tpu.dynamic_rotate %244 by %c241_i32_138 dim 1 : vector<8x256xf32>, i32 -> vector<8x256xf32>
    %260 = arith.select %18, %259, %258 : vector<8x256xi1>, vector<8x256xf32>
    %261 = arith.truncf %260 : vector<8x256xf32> to vector<8x256xbf16>
    %c240 = arith.constant 240 : index
    %c0_139 = arith.constant 0 : index
    %262 = vector.load %arg10[%c240, %c0_139] : memref<288x256xbf16, #tpu.memory_space<vmem>>, vector<8x256xbf16>
    tpu.vector_store %arg10[%c240, %c0_139], %261 {strides = array<i32>} : memref<288x256xbf16, #tpu.memory_space<vmem>>, vector<8x256xbf16>,
    %263 = arith.truncf %244 : vector<8x256xf32> to vector<8x256xbf16>
    %c248 = arith.constant 248 : index
    %c0_140 = arith.constant 0 : index
    %264 = vector.load %arg10[%c248, %c0_140] : memref<288x256xbf16, #tpu.memory_space<vmem>>, vector<8x256xbf16>
    tpu.vector_store %arg10[%c248, %c0_140], %263 {strides = array<i32>} : memref<288x256xbf16, #tpu.memory_space<vmem>>, vector<8x256xbf16>,
    %c255_i32_141 = arith.constant 255 : i32
    %265 = tpu.dynamic_rotate %244 by %c255_i32_141 dim 1 : vector<8x256xf32>, i32 -> vector<8x256xf32>
    %c15_i32_142 = arith.constant 15 : i32
    %266 = tpu.dynamic_rotate %244 by %c15_i32_142 dim 1 : vector<8x256xf32>, i32 -> vector<8x256xf32>
    %267 = arith.select %20, %266, %265 : vector<8x256xi1>, vector<8x256xf32>
    %268 = arith.truncf %267 : vector<8x256xf32> to vector<8x256xbf16>
    %c256 = arith.constant 256 : index
    %c0_143 = arith.constant 0 : index
    %269 = vector.load %arg10[%c256, %c0_143] : memref<288x256xbf16, #tpu.memory_space<vmem>>, vector<8x256xbf16>
    tpu.vector_store %arg10[%c256, %c0_143], %268 {strides = array<i32>} : memref<288x256xbf16, #tpu.memory_space<vmem>>, vector<8x256xbf16>,
    %c241_i32_144 = arith.constant 241 : i32
    %270 = tpu.dynamic_rotate %244 by %c241_i32_144 dim 1 : vector<8x256xf32>, i32 -> vector<8x256xf32>
    %c225_i32_145 = arith.constant 225 : i32
    %271 = tpu.dynamic_rotate %244 by %c225_i32_145 dim 1 : vector<8x256xf32>, i32 -> vector<8x256xf32>
    %272 = arith.select %18, %271, %270 : vector<8x256xi1>, vector<8x256xf32>
    %273 = arith.truncf %272 : vector<8x256xf32> to vector<8x256xbf16>
    %c264 = arith.constant 264 : index
    %c0_146 = arith.constant 0 : index
    %274 = vector.load %arg10[%c264, %c0_146] : memref<288x256xbf16, #tpu.memory_space<vmem>>, vector<8x256xbf16>
    tpu.vector_store %arg10[%c264, %c0_146], %273 {strides = array<i32>} : memref<288x256xbf16, #tpu.memory_space<vmem>>, vector<8x256xbf16>,
    %c240_i32_147 = arith.constant 240 : i32
    %275 = tpu.dynamic_rotate %244 by %c240_i32_147 dim 1 : vector<8x256xf32>, i32 -> vector<8x256xf32>
    %276 = arith.truncf %275 : vector<8x256xf32> to vector<8x256xbf16>
    %c272 = arith.constant 272 : index
    %c0_148 = arith.constant 0 : index
    %277 = vector.load %arg10[%c272, %c0_148] : memref<288x256xbf16, #tpu.memory_space<vmem>>, vector<8x256xbf16>
    tpu.vector_store %arg10[%c272, %c0_148], %276 {strides = array<i32>} : memref<288x256xbf16, #tpu.memory_space<vmem>>, vector<8x256xbf16>,
    %c239_i32_149 = arith.constant 239 : i32
    %278 = tpu.dynamic_rotate %244 by %c239_i32_149 dim 1 : vector<8x256xf32>, i32 -> vector<8x256xf32>
    %c255_i32_150 = arith.constant 255 : i32
    %279 = tpu.dynamic_rotate %244 by %c255_i32_150 dim 1 : vector<8x256xf32>, i32 -> vector<8x256xf32>
    %280 = arith.select %20, %279, %278 : vector<8x256xi1>, vector<8x256xf32>
    %281 = arith.truncf %280 : vector<8x256xf32> to vector<8x256xbf16>
    %c280 = arith.constant 280 : index
    %c0_151 = arith.constant 0 : index
    %282 = vector.load %arg10[%c280, %c0_151] : memref<288x256xbf16, #tpu.memory_space<vmem>>, vector<8x256xbf16>
    tpu.vector_store %arg10[%c280, %c0_151], %281 {strides = array<i32>} : memref<288x256xbf16, #tpu.memory_space<vmem>>, vector<8x256xbf16>,
    %c0_152 = arith.constant 0 : index
    %c0_153 = arith.constant 0 : index
    %283 = vector.load %arg5[%c0_152, %c0_153] : memref<8x288xbf16, #tpu.memory_space<vmem>>, vector<8x288xbf16>
    %c0_154 = arith.constant 0 : index
    %c0_155 = arith.constant 0 : index
    %284 = vector.load %arg10[%c0_154, %c0_155] : memref<288x256xbf16, #tpu.memory_space<vmem>>, vector<288x256xbf16>
    %cst_156 = arith.constant dense<0.000000e+00> : vector<8x256xf32>
    %285 = tpu.matmul %283, %284, %cst_156 {dimension_numbers = #tpu.dot_dimension_numbers<[1], [0], [0], [1], [0, 0, 1, 1], [], []>} : vector<8x288xbf16>, vector<288x256xbf16>, vector<8x256xf32> -> vector<8x256xf32>
    %c3 = arith.constant 3 : index
    %c0_157 = arith.constant 0 : index
    %c0_158 = arith.constant 0 : index
    %286 = vector.load %arg6[%c3, %c0_157, %c0_158] : memref<4x8x1xf32, #tpu.memory_space<vmem>>, vector<1x8x1xf32>
    %287 = vector.shape_cast %286 : vector<1x8x1xf32> to vector<8x1xf32>
    %288 = vector.broadcast %287 : vector<8x1xf32> to vector<8x256xf32>
    %289 = arith.addf %285, %288 : vector<8x256xf32>
    %c0_159 = arith.constant 0 : index
    %c0_160 = arith.constant 0 : index
    %c0_161 = arith.constant 0 : index
    %290 = vector.load %arg9[%c0_159, %c0_160, %c0_161] : memref<1x8x256xf32, #tpu.memory_space<vmem>>, vector<1x8x256xf32>
    %291 = vector.shape_cast %290 : vector<1x8x256xf32> to vector<8x256xf32>
    %292 = vector.shape_cast %289 : vector<8x256xf32> to vector<1x8x256xf32>
    tpu.vector_store %arg9[%c0_159, %c0_160, %c0_161], %292 {strides = array<i32>} : memref<1x8x256xf32, #tpu.memory_space<vmem>>, vector<1x8x256xf32>,
    return
  }
  func.func @transform_0(%arg0: i32) -> (i32, i32, i32) {
    %c0_i32 = arith.constant 0 : i32
    %c0_i32_0 = arith.constant 0 : i32
    %c0_i32_1 = arith.constant 0 : i32
    return %arg0, %c0_i32, %c0_i32_0 : i32, i32, i32
  }
  func.func @transform_1(%arg0: i32) -> (i32, i32) {
    %c0_i32 = arith.constant 0 : i32
    %c0_i32_0 = arith.constant 0 : i32
    %c0_i32_1 = arith.constant 0 : i32
    return %c0_i32, %c0_i32_0 : i32, i32
  }
  func.func @transform_2(%arg0: i32) -> (i32, i32) {
    %c0_i32 = arith.constant 0 : i32
    %c0_i32_0 = arith.constant 0 : i32
    %c0_i32_1 = arith.constant 0 : i32
    return %c0_i32, %c0_i32_0 : i32, i32
  }
  func.func @transform_3(%arg0: i32) -> (i32, i32) {
    %c0_i32 = arith.constant 0 : i32
    %c0_i32_0 = arith.constant 0 : i32
    %c0_i32_1 = arith.constant 0 : i32
    return %c0_i32, %c0_i32_0 : i32, i32
  }
  func.func @transform_4(%arg0: i32) -> (i32, i32) {
    %c0_i32 = arith.constant 0 : i32
    %c0_i32_0 = arith.constant 0 : i32
    %c0_i32_1 = arith.constant 0 : i32
    return %c0_i32, %c0_i32_0 : i32, i32
  }
  func.func @transform_5(%arg0: i32) -> (i32, i32, i32) {
    %c0_i32 = arith.constant 0 : i32
    %c0_i32_0 = arith.constant 0 : i32
    %c0_i32_1 = arith.constant 0 : i32
    %c0_i32_2 = arith.constant 0 : i32
    return %c0_i32, %c0_i32_0, %c0_i32_1 : i32, i32, i32
  }
  func.func @transform_6(%arg0: i32) -> (i32, i32, i32) {
    %c0_i32 = arith.constant 0 : i32
    %c0_i32_0 = arith.constant 0 : i32
    %c0_i32_1 = arith.constant 0 : i32
    %c0_i32_2 = arith.constant 0 : i32
    return %c0_i32, %c0_i32_0, %c0_i32_1 : i32, i32, i32
  }
  func.func @transform_7(%arg0: i32) -> (i32, i32, i32) {
    %c0_i32 = arith.constant 0 : i32
    %c0_i32_0 = arith.constant 0 : i32
    %c0_i32_1 = arith.constant 0 : i32
    %c0_i32_2 = arith.constant 0 : i32
    return %c0_i32, %c0_i32_0, %c0_i32_1 : i32, i32, i32
  }
  func.func @transform_8(%arg0: i32) -> (i32, i32, i32) {
    %c0_i32 = arith.constant 0 : i32
    %c0_i32_0 = arith.constant 0 : i32
    %c0_i32_1 = arith.constant 0 : i32
    return %arg0, %c0_i32, %c0_i32_0 : i32, i32, i32
  }
}

</mosaic_0001>

<llo_original>
// kernel: tile.42
$region0: #{tile.42}
  #allocation0 [shape = 's32[1]{0}', space=sflag, size = 0x4, scoped, tag = 'scoped memory for tile.42']
  %s0 = inlined_call_operand.vmem [shape: f32[4], index: 0, kind: input, shape index: {}]
  %s1 = inlined_call_operand.vmem [shape: f32[2,1,1,4], index: 1, kind: output, shape index: {}]
  // Predicated region
  $region2: #{tile.42} parent=0 // pred_check
    _
  $region3: #{tile.42} parent=0 // pred_check_branch
    %3 = sbr.rel (0) target = $region5
  $region4: #{tile.42} parent=0 // pred_region
    _
  $region5: #{tile.42} parent=0 // pred_fallthru
    _
  %v4 = vld [vmem:[%s0] ss:$0 sm:$0xff]
  %5 = vst [vmem:[%s1] sm:$0x3] %v4

// kernel: tile.0
$region0: #{tile.0}
  %s0 = inlined_call_operand.vmem [shape: f32[2,1,1,4], index: 0, kind: input, shape index: {}]
  %s1 = inlined_call_operand.vmem [shape: f32[1,8,1], index: 1, kind: output, shape index: {}]
  $region1: #{tile.0} parent=0
    #allocation0 [shape = 'u8[4096]{0}', space=vmem, size = 0x1000, scoped, tag = 'scoped mem for input reshape']
    %s3 = sshllo.u32 0, 2
    %v4 = vld [vmem:[%s0] sm:%s3]
    %5 = vst [vmem:[#allocation0] sm:%s3] %v4
    %v6 = vld [vmem:[#allocation0] sm:$0x3]
    %vm7 = vcmask 7168
    %8 = vst.msk [vmem:[%s1] ss:$4 sm:$0x3] %vm7, %v6
    %v9 = vld [vmem:[#allocation0] sm:$0x3]
    %10 = vrot.lane.b32.xlu0 %v9, 127
    %v11 = vpop.permute.xlu0 %10
    %vm12 = vcmask 7168
    %s13 = scalar_lea.vmem %s1, 1
    %14 = vst.msk [vmem:[%s13] ss:$4 sm:$0x3] %vm12, %v11
    %v15 = vld [vmem:[#allocation0] sm:$0x3]
    %16 = vrot.lane.b32.xlu0 %v15, 126
    %v17 = vpop.permute.xlu0 %16
    %vm18 = vcmask 7168
    %s19 = scalar_lea.vmem %s1, 2
    %20 = vst.msk [vmem:[%s19] ss:$4 sm:$0x3] %vm18, %v17
    %v21 = vld [vmem:[#allocation0] sm:$0x3]
    %22 = vrot.lane.b32.xlu0 %v21, 125
    %v23 = vpop.permute.xlu0 %22
    %vm24 = vcmask 7168
    %s25 = scalar_lea.vmem %s1, 3
    %26 = vst.msk [vmem:[%s25] ss:$4 sm:$0x3] %vm24, %v23

// kernel: tile.65
$region0: #{tile.65}
  %s0 = inlined_call_operand.vmem [shape: f32[2,1,1,4], index: 0, kind: input, shape index: {}]
  %s1 = inlined_call_operand.vmem [shape: f32[1,8,1], index: 1, kind: output, shape index: {}]
  $region1: #{tile.65} parent=0
    #allocation0 [shape = 'u8[4096]{0}', space=vmem, size = 0x1000, scoped, tag = 'scoped mem for output reshape']
    #allocation1 [shape = 'u8[4096]{0}', space=vmem, size = 0x1000, scoped, tag = 'scoped mem for input reshape']
    %s3 = sshllo.u32 0, 2
    %v4 = vld [vmem:[%s0] sm:%s3]
    %5 = vst [vmem:[#allocation1] sm:%s3] %v4
    %v6 = vld [vmem:[#allocation1] sm:$0x1]
    %vm7 = vcmask 31744
    %8 = vst.msk [vmem:[#allocation0] sm:$0x1] %vm7, %v6
    %s9 = scalar_lea.vmem [#allocation1], 1
    %v10 = vld [vmem:[%s9] sm:$0x1]
    %11 = vrot.lane.b32.xlu0 %v10, 4
    %v12 = vpop.permute.xlu0 %11
    %vm13 = vcmask 64544
    %14 = vst.msk [vmem:[#allocation0] sm:$0x1] %vm13, %v12
    %s16 = sshllo.u32 0, 1
    %v18 = vld [vmem:[#allocation0] sm:%s16]
    %s19 = sshllo.u32 0, 1
    %20 = vst [vmem:[%s1] sm:%s19] %v18

// kernel: conv_block_ine_dense.1
$region0: #{conv_block_ine_dense.1}
  #allocation0 [shape = 'u32[]', space=smem, size = 0x4, offset = 0x4, fixed_abs, tag = 'smem constant byte address 0x4 - core index']
  #allocation1 [shape = 'u32[144,128]{1,0:T(1,128)}', space=vmem, size = 0x12000, scoped, tag = 'internal scratch']
  #allocation2 [shape = 'bf16[288,256]{1,0:T(16,128)(2,1)}', space=vmem, size = 0x24000, scoped, tag = 'scratch operand']
  %s0 = inlined_call_operand.vmem [shape: f32[1,8,256], index: 0, kind: input, shape index: {}]
  %s1 = inlined_call_operand.vmem [shape: bf16[8,72], index: 1, kind: input, shape index: {}]
  %s2 = inlined_call_operand.vmem [shape: bf16[8,144], index: 2, kind: input, shape index: {}]
  %s3 = inlined_call_operand.vmem [shape: bf16[8,216], index: 3, kind: input, shape index: {}]
  %s4 = inlined_call_operand.vmem [shape: bf16[8,288], index: 4, kind: input, shape index: {}]
  %s5 = inlined_call_operand.vmem [shape: f32[4,8,1], index: 5, kind: input, shape index: {}]
  %s6 = inlined_call_operand.vmem [shape: f32[3,8,1], index: 6, kind: input, shape index: {}]
  %s7 = inlined_call_operand.vmem [shape: f32[3,8,1], index: 7, kind: input, shape index: {}]
  %s8 = inlined_call_operand.vmem [shape: f32[1,8,256], index: 8, kind: output, shape index: {}]
  %s9 = sld [smem:[#allocation0]]
  $region42: #{conv_block_ine_dense.1} parent=0
    _
  %s11 = ssub.s32 1, %s9
  %s12 = scalar_select 0, %s11, %s9
  // Predicated region
  $region2: #{conv_block_ine_dense.1} parent=0 // pred_check
    _
  $region3: #{conv_block_ine_dense.1} parent=0 // pred_check_branch
    %14 = sbr.rel (0) target = $region5
  $region4: #{conv_block_ine_dense.1} parent=0 // pred_region
    _
  $region5: #{conv_block_ine_dense.1} parent=0 // pred_fallthru
    _
  // Predicated region
  $region6: #{conv_block_ine_dense.1} parent=0 // pred_check
    _
  $region7: #{conv_block_ine_dense.1} parent=0 // pred_check_branch
    %16 = sbr.rel (0) target = $region9
  $region8: #{conv_block_ine_dense.1} parent=0 // pred_region
    _
  $region9: #{conv_block_ine_dense.1} parent=0 // pred_fallthru
    _
  // Predicated region
  $region10: #{conv_block_ine_dense.1} parent=0 // pred_check
    _
  $region11: #{conv_block_ine_dense.1} parent=0 // pred_check_branch
    %18 = sbr.rel (0) target = $region13
  $region12: #{conv_block_ine_dense.1} parent=0 // pred_region
    _
  $region13: #{conv_block_ine_dense.1} parent=0 // pred_fallthru
    _
  // Predicated region
  $region14: #{conv_block_ine_dense.1} parent=0 // pred_check
    _
  $region15: #{conv_block_ine_dense.1} parent=0 // pred_check_branch
    %20 = sbr.rel (0) target = $region17
  $region16: #{conv_block_ine_dense.1} parent=0 // pred_region
    _
  $region17: #{conv_block_ine_dense.1} parent=0 // pred_fallthru
    _
  // Predicated region
  $region18: #{conv_block_ine_dense.1} parent=0 // pred_check
    _
  $region19: #{conv_block_ine_dense.1} parent=0 // pred_check_branch
    %22 = sbr.rel (0) target = $region21
  $region20: #{conv_block_ine_dense.1} parent=0 // pred_region
    _
  $region21: #{conv_block_ine_dense.1} parent=0 // pred_fallthru
    _
  // Predicated region
  $region22: #{conv_block_ine_dense.1} parent=0 // pred_check
    _
  $region23: #{conv_block_ine_dense.1} parent=0 // pred_check_branch
    %24 = sbr.rel (0) target = $region25
  $region24: #{conv_block_ine_dense.1} parent=0 // pred_region
    _
  $region25: #{conv_block_ine_dense.1} parent=0 // pred_fallthru
    _
  // Predicated region
  $region26: #{conv_block_ine_dense.1} parent=0 // pred_check
    _
  $region27: #{conv_block_ine_dense.1} parent=0 // pred_check_branch
    %26 = sbr.rel (0) target = $region29
  $region28: #{conv_block_ine_dense.1} parent=0 // pred_region
    _
  $region29: #{conv_block_ine_dense.1} parent=0 // pred_fallthru
    _
  // Predicated region
  $region30: #{conv_block_ine_dense.1} parent=0 // pred_check
    _
  $region31: #{conv_block_ine_dense.1} parent=0 // pred_check_branch
    %28 = sbr.rel (0) target = $region33
  $region32: #{conv_block_ine_dense.1} parent=0 // pred_region
    _
  $region33: #{conv_block_ine_dense.1} parent=0 // pred_fallthru
    _
  %v30 = vlaneseq
  %v31 = vand.u32 %v30, 127
  %v32 = vadd.s32 %v31, 128
  %vm33 = vcmp.lt.s32.totalorder %v31, 0
  %v34 = vsub.s32 0, %v31
  %v35 = vsel %vm33, %v34, %v31
  %v36 = vshrl.u32 %v35, 4
  %v37 = vand.u32 %v35, 15
  %v38 = vsub.s32 0, %v37
  %v39 = vsel %vm33, %v38, %v37
  %vm40 = vcmp.lt.s32.totalorder %v32, 0
  %v41 = vsub.s32 0, %v32
  %v42 = vsel %vm40, %v41, %v32
  %v43 = vshrl.u32 %v42, 4
  %v44 = vand.u32 %v42, 15
  %v45 = vsub.s32 0, %v44
  %v46 = vsel %vm40, %v45, %v44
  %vm47 = vcmp.ne.s32.totalorder %v39, 0
  %vm48 = vcmp.ne.s32.totalorder %v46, 0
  %vm49 = vcmp.lt.s32.totalorder %v39, 0
  %vm50 = vcmp.lt.s32.totalorder %v46, 0
  %vm51 = vmand %vm49, %vm47
  %vm52 = vmand %vm50, %vm48
  %v53 = vadd.s32 %v39, 16
  %v54 = vadd.s32 %v46, 16
  %v55 = vsel %vm51, %v53, %v39
  %v56 = vsel %vm52, %v54, %v46
  %vm57 = vcmp.lt.s32.totalorder %v55, 1
  %vm58 = vcmp.lt.s32.totalorder %v56, 1
  %vm59 = vcmp.ge.s32.totalorder %v55, 15
  %vm60 = vcmp.ge.s32.totalorder %v56, 15
  %v61 = vld [vmem:[%s0] sm:$0xff]
  %v62 = vld [vmem:[%s0 + $0x8] sm:$0xff]
  %63 = vrot.lane.b32.xlu0 %v61, 17
  %v64 = vpop.permute.xlu0 %63
  %65 = vrot.lane.b32.xlu0 %v62, 17
  %v66 = vpop.permute.xlu0 %65
  %vm67 = vcmp.lt.s32.totalorder %v31, 17
  %v68 = vsel %vm67, %v64, %v66
  %v69 = vsel %vm67, %v66, %v64
  %70 = vrot.lane.b32.xlu0 %v61, 1
  %v71 = vpop.permute.xlu0 %70
  %72 = vrot.lane.b32.xlu0 %v62, 1
  %v73 = vpop.permute.xlu0 %72
  %vm74 = vcmp.lt.s32.totalorder %v31, 1
  %v75 = vsel %vm74, %v71, %v73
  %v76 = vsel %vm74, %v73, %v71
  %v77 = vsel %vm57, %v76, %v69
  %v78 = vsel %vm58, %v75, %v68
  %v79 = vpack.c.bf16 %v77, %v77
  %v80 = vpack.c.bf16 %v78, %v78
  %81 = vst [vmem:[#allocation2] sm:$0xf] %v79
  %82 = vst [vmem:[#allocation2 + $0x8] sm:$0xf] %v80
  %83 = vrot.lane.b32.xlu0 %v61, 16
  %v84 = vpop.permute.xlu0 %83
  %85 = vrot.lane.b32.xlu0 %v62, 16
  %v86 = vpop.permute.xlu0 %85
  %vm87 = vcmp.lt.s32.totalorder %v31, 16
  %v88 = vsel %vm87, %v84, %v86
  %v89 = vsel %vm87, %v86, %v84
  %v90 = vpack.c.bf16 %v89, %v89
  %v91 = vpack.c.bf16 %v88, %v88
  %v94 = vrot.slane %v90, 4
  %v95 = vrot.slane %v91, 4
  %98 = vst [vmem:[#allocation2] sm:$0xf0] %v94
  %99 = vst [vmem:[#allocation2 + $0x8] sm:$0xf0] %v95
  %100 = vrot.lane.b32.xlu0 %v61, 15
  %v101 = vpop.permute.xlu0 %100
  %102 = vrot.lane.b32.xlu0 %v62, 15
  %v103 = vpop.permute.xlu0 %102
  %vm104 = vcmp.lt.s32.totalorder %v31, 15
  %v105 = vsel %vm104, %v101, %v103
  %v106 = vsel %vm104, %v103, %v101
  %107 = vrot.lane.b32.xlu0 %v61, 31
  %v108 = vpop.permute.xlu0 %107
  %109 = vrot.lane.b32.xlu0 %v62, 31
  %v110 = vpop.permute.xlu0 %109
  %vm111 = vcmp.lt.s32.totalorder %v31, 31
  %v112 = vsel %vm111, %v108, %v110
  %v113 = vsel %vm111, %v110, %v108
  %v114 = vsel %vm59, %v113, %v106
  %v115 = vsel %vm60, %v112, %v105
  %v116 = vpack.c.bf16 %v114, %v114
  %v117 = vpack.c.bf16 %v115, %v115
  %118 = vst [vmem:[#allocation2 + $0x10] sm:$0xf] %v116
  %119 = vst [vmem:[#allocation2 + $0x18] sm:$0xf] %v117
  %120 = vrot.lane.b32.xlu0 %v61, 113
  %v121 = vpop.permute.xlu0 %120
  %122 = vrot.lane.b32.xlu0 %v62, 113
  %v123 = vpop.permute.xlu0 %122
  %vm124 = vcmp.lt.s32.totalorder %v31, 113
  %v125 = vsel %vm124, %v121, %v123
  %v126 = vsel %vm124, %v123, %v121
  %v127 = vsel %vm57, %v125, %v76
  %v128 = vsel %vm58, %v126, %v75
  %v129 = vpack.c.bf16 %v127, %v127
  %v130 = vpack.c.bf16 %v128, %v128
  %v133 = vrot.slane %v129, 4
  %v134 = vrot.slane %v130, 4
  %137 = vst [vmem:[#allocation2 + $0x10] sm:$0xf0] %v133
  %138 = vst [vmem:[#allocation2 + $0x18] sm:$0xf0] %v134
  %v139 = vpack.c.bf16 %v61, %v61
  %v140 = vpack.c.bf16 %v62, %v62
  %141 = vst [vmem:[#allocation2 + $0x20] sm:$0xf] %v139
  %142 = vst [vmem:[#allocation2 + $0x28] sm:$0xf] %v140
  %143 = vrot.lane.b32.xlu0 %v61, 127
  %v144 = vpop.permute.xlu0 %143
  %145 = vrot.lane.b32.xlu0 %v62, 127
  %v146 = vpop.permute.xlu0 %145
  %vm147 = vcmp.lt.s32.totalorder %v31, 127
  %v148 = vsel %vm147, %v144, %v146
  %v149 = vsel %vm147, %v146, %v144
  %v150 = vsel %vm59, %v106, %v148
  %v151 = vsel %vm60, %v105, %v149
  %v152 = vpack.c.bf16 %v150, %v150
  %v153 = vpack.c.bf16 %v151, %v151
  %v156 = vrot.slane %v152, 4
  %v157 = vrot.slane %v153, 4
  %160 = vst [vmem:[#allocation2 + $0x20] sm:$0xf0] %v156
  %161 = vst [vmem:[#allocation2 + $0x28] sm:$0xf0] %v157
  %162 = vrot.lane.b32.xlu0 %v61, 97
  %v163 = vpop.permute.xlu0 %162
  %164 = vrot.lane.b32.xlu0 %v62, 97
  %v165 = vpop.permute.xlu0 %164
  %vm166 = vcmp.lt.s32.totalorder %v31, 97
  %v167 = vsel %vm166, %v163, %v165
  %v168 = vsel %vm166, %v165, %v163
  %v169 = vsel %vm57, %v167, %v125
  %v170 = vsel %vm58, %v168, %v126
  %v171 = vpack.c.bf16 %v169, %v169
  %v172 = vpack.c.bf16 %v170, %v170
  %173 = vst [vmem:[#allocation2 + $0x30] sm:$0xf] %v171
  %174 = vst [vmem:[#allocation2 + $0x38] sm:$0xf] %v172
  %175 = vrot.lane.b32.xlu0 %v61, 112
  %v176 = vpop.permute.xlu0 %175
  %177 = vrot.lane.b32.xlu0 %v62, 112
  %v178 = vpop.permute.xlu0 %177
  %vm179 = vcmp.lt.s32.totalorder %v31, 112
  %v180 = vsel %vm179, %v176, %v178
  %v181 = vsel %vm179, %v178, %v176
  %v182 = vpack.c.bf16 %v180, %v180
  %v183 = vpack.c.bf16 %v181, %v181
  %v186 = vrot.slane %v182, 4
  %v187 = vrot.slane %v183, 4
  %190 = vst [vmem:[#allocation2 + $0x30] sm:$0xf0] %v186
  %191 = vst [vmem:[#allocation2 + $0x38] sm:$0xf0] %v187
  %192 = vrot.lane.b32.xlu0 %v61, 111
  %v193 = vpop.permute.xlu0 %192
  %194 = vrot.lane.b32.xlu0 %v62, 111
  %v195 = vpop.permute.xlu0 %194
  %vm196 = vcmp.lt.s32.totalorder %v31, 111
  %v197 = vsel %vm196, %v193, %v195
  %v198 = vsel %vm196, %v195, %v193
  %v199 = vsel %vm59, %v148, %v197
  %v200 = vsel %vm60, %v149, %v198
  %v201 = vpack.c.bf16 %v199, %v199
  %v202 = vpack.c.bf16 %v200, %v200
  %203 = vst [vmem:[#allocation2 + $0x40] sm:$0xf] %v201
  %204 = vst [vmem:[#allocation2 + $0x48] sm:$0xf] %v202
  %v205 = vld [vmem:[%s1] sm:$0xf]
  %v206 = vld [vmem:[#allocation2] sm:$0xff]
  %v207 = vld [vmem:[#allocation2 + $0x8] sm:$0xff]
  %v208 = vld [vmem:[#allocation2 + $0x10] sm:$0xff]
  %v209 = vld [vmem:[#allocation2 + $0x18] sm:$0xff]
  %v210 = vld [vmem:[#allocation2 + $0x20] sm:$0xff]
  %v211 = vld [vmem:[#allocation2 + $0x28] sm:$0xff]
  %v212 = vld [vmem:[#allocation2 + $0x30] sm:$0xff]
  %v213 = vld [vmem:[#allocation2 + $0x38] sm:$0xff]
  %v214 = vld [vmem:[#allocation2 + $0x40] sm:$0xf]
  %v215 = vld [vmem:[#allocation2 + $0x48] sm:$0xf]
  %v216 = vld [vmem:[%s5] sm:$0xff]
  %218 = vset.pattern.permute.xlu0 0
  %219 = vperm.xlu0 %218, %v216
  %v220 = vpop.permute.xlu0 %219
  %vm222 = vcmask 588800
  %v224 = vsel %vm222, %v205, 0
  %vm226 = vcmask 1043456
  %v228 = vsel %vm226, %v214, 0
  %v231 = vsel %vm226, %v215, 0
  %233 = vmatprep.subr.bf16.mxu0 %v207
  %234 = vmatpush1.bf16.msra.mxu0 %v206
  %235 = vmatprep.subr.bf16.mxu0 %v209
  %236 = vmatpush1.bf16.msra.mxu0 %v208
  %237 = vmatprep.subr.bf16.mxu0 %v211
  %238 = vmatpush1.bf16.msra.mxu0 %v210
  %239 = vmatprep.subr.bf16.mxu0 %v213
  %240 = vmatpush1.bf16.msra.mxu0 %v212
  %241 = vmatprep.subr.bf16.mxu0 %v231
  %242 = vmatpush1.bf16.msra.mxu0 %v228
  %243 = vmatprep.subr.bf16.mxu0 0
  %244 = vmatpush1.bf16.msra.mxu0 0
  %245 = vmatprep.subr.bf16.mxu0 0
  %246 = vmatpush1.bf16.msra.mxu0 0
  %247 = vmatprep.subr.bf16.mxu0 0
  %248 = vmatpush1.bf16.msra.mxu0 0
  %249 = vmatprep.subr.bf16.mxu0 0
  %250 = vmatpush1.bf16.msra.mxu0 0
  %251 = vmatprep.subr.bf16.mxu0 0
  %252 = vmatpush1.bf16.msra.mxu0 0
  %253 = vmatprep.subr.bf16.mxu0 0
  %254 = vmatpush1.bf16.msra.mxu0 0
  %255 = vmatprep.subr.bf16.mxu0 0
  %256 = vmatpush1.bf16.msra.mxu0 0
  %257 = vmatprep.subr.bf16.mxu0 0
  %258 = vmatpush1.bf16.msra.mxu0 0
  %259 = vmatprep.subr.bf16.mxu0 0
  %260 = vmatpush1.bf16.msra.mxu0 0
  %261 = vmatprep.subr.bf16.mxu0 0
  %262 = vmatpush1.bf16.msra.mxu0 0
  %263 = vmatprep.subr.bf16.mxu0 0
  %264 = vmatpush1.bf16.msra.mxu0 0
  %265 = vmatprep.mubr.bf16.mxu0 0
  %266 = vmatmul.mubr.bf16.gmra.mrb[0].mxu0 %v224
  %v267 = vpop.f32.mrb[0].mxu0
  %v268 = vadd.f32 %v220, %v267
  %v269 = vpop.f32.mrb[0].mxu0
  %v270 = vadd.f32 %v220, %v269
  %v271 = vpop.f32.mrb[0].mxu0
  %v272 = vpop.f32.mrb[0].mxu0
  %273 = vdwg.mxu0
  %v274 = vmax.f32 %v268, 0.0
  %v275 = vmax.f32 %v270, 0.0
  %v276 = vadd.f32 %v274, %v275
  %277 = vadd.xlane.f32.xlu0 %v276
  %v278 = vpop.xlane.xlu0 %277
  %v279 = vmul.f32 %v274, %v274
  %v280 = vmul.f32 %v275, %v275
  %v281 = vadd.f32 %v279, %v280
  %282 = vadd.xlane.f32.xlu0 %v281
  %v283 = vpop.xlane.xlu0 %282
  %v284 = vmul.f32 %v278, 0.00390625
  %v285 = vmul.f32 %v283, 0.00390625
  %v286 = vmul.f32 %v284, %v284
  %v287 = vsub.f32 %v285, %v286
  %v288 = vmax.f32 %v287, 0.0
  %v289 = vadd.f32 %v288, 1e-05
  %v290 = vrsqrt.pop %v289
  %v291 = vld [vmem:[%s6] sm:$0xff]
  %v292 = vmul.f32 %v290, %v291
  %294 = vset.pattern.permute.xlu0 0
  %295 = vperm.xlu0 %294, %v292
  %v296 = vpop.permute.xlu0 %295
  %v298 = vmul.f32 %v274, %v296
  %v299 = vmul.f32 %v275, %v296
  %v300 = vld [vmem:[%s7] sm:$0xff]
  %v301 = vmul.f32 %v284, %v292
  %v302 = vsub.f32 %v300, %v301
  %304 = vset.pattern.permute.xlu0 0
  %305 = vperm.xlu0 %304, %v302
  %v306 = vpop.permute.xlu0 %305
  %v308 = vadd.f32 %v298, %v306
  %v309 = vadd.f32 %v299, %v306
  %310 = vrot.lane.b32.xlu0 %v308, 17
  %v311 = vpop.permute.xlu0 %310
  %312 = vrot.lane.b32.xlu0 %v309, 17
  %v313 = vpop.permute.xlu0 %312
  %v314 = vsel %vm67, %v311, %v313
  %v315 = vsel %vm67, %v313, %v311
  %316 = vrot.lane.b32.xlu0 %v308, 1
  %v317 = vpop.permute.xlu0 %316
  %318 = vrot.lane.b32.xlu0 %v309, 1
  %v319 = vpop.permute.xlu0 %318
  %v320 = vsel %vm74, %v317, %v319
  %v321 = vsel %vm74, %v319, %v317
  %v322 = vsel %vm57, %v321, %v315
  %v323 = vsel %vm58, %v320, %v314
  %v324 = vpack.c.bf16 %v322, %v322
  %v325 = vpack.c.bf16 %v323, %v323
  %v328 = vrot.slane %v324, 4
  %v329 = vrot.slane %v325, 4
  %332 = vst [vmem:[#allocation2 + $0x40] sm:$0xf0] %v328
  %333 = vst [vmem:[#allocation2 + $0x48] sm:$0xf0] %v329
  %334 = vrot.lane.b32.xlu0 %v308, 16
  %v335 = vpop.permute.xlu0 %334
  %336 = vrot.lane.b32.xlu0 %v309, 16
  %v337 = vpop.permute.xlu0 %336
  %v338 = vsel %vm87, %v335, %v337
  %v339 = vsel %vm87, %v337, %v335
  %v340 = vpack.c.bf16 %v339, %v339
  %v341 = vpack.c.bf16 %v338, %v338
  %342 = vst [vmem:[#allocation2 + $0x50] sm:$0xf] %v340
  %343 = vst [vmem:[#allocation2 + $0x58] sm:$0xf] %v341
  %344 = vrot.lane.b32.xlu0 %v308, 15
  %v345 = vpop.permute.xlu0 %344
  %346 = vrot.lane.b32.xlu0 %v309, 15
  %v347 = vpop.permute.xlu0 %346
  %v348 = vsel %vm104, %v345, %v347
  %v349 = vsel %vm104, %v347, %v345
  %350 = vrot.lane.b32.xlu0 %v308, 31
  %v351 = vpop.permute.xlu0 %350
  %352 = vrot.lane.b32.xlu0 %v309, 31
  %v353 = vpop.permute.xlu0 %352
  %v354 = vsel %vm111, %v351, %v353
  %v355 = vsel %vm111, %v353, %v351
  %v356 = vsel %vm59, %v355, %v349
  %v357 = vsel %vm60, %v354, %v348
  %v358 = vpack.c.bf16 %v356, %v356
  %v359 = vpack.c.bf16 %v357, %v357
  %v362 = vrot.slane %v358, 4
  %v363 = vrot.slane %v359, 4
  %366 = vst [vmem:[#allocation2 + $0x50] sm:$0xf0] %v362
  %367 = vst [vmem:[#allocation2 + $0x58] sm:$0xf0] %v363
  %368 = vrot.lane.b32.xlu0 %v308, 113
  %v369 = vpop.permute.xlu0 %368
  %370 = vrot.lane.b32.xlu0 %v309, 113
  %v371 = vpop.permute.xlu0 %370
  %v372 = vsel %vm124, %v369, %v371
  %v373 = vsel %vm124, %v371, %v369
  %v374 = vsel %vm57, %v372, %v321
  %v375 = vsel %vm58, %v373, %v320
  %v376 = vpack.c.bf16 %v374, %v374
  %v377 = vpack.c.bf16 %v375, %v375
  %378 = vst [vmem:[#allocation2 + $0x60] sm:$0xf] %v376
  %379 = vst [vmem:[#allocation2 + $0x68] sm:$0xf] %v377
  %v380 = vpack.c.bf16 %v308, %v308
  %v381 = vpack.c.bf16 %v309, %v309
  %v384 = vrot.slane %v380, 4
  %v385 = vrot.slane %v381, 4
  %388 = vst [vmem:[#allocation2 + $0x60] sm:$0xf0] %v384
  %389 = vst [vmem:[#allocation2 + $0x68] sm:$0xf0] %v385
  %390 = vrot.lane.b32.xlu0 %v308, 127
  %v391 = vpop.permute.xlu0 %390
  %392 = vrot.lane.b32.xlu0 %v309, 127
  %v393 = vpop.permute.xlu0 %392
  %v394 = vsel %vm147, %v391, %v393
  %v395 = vsel %vm147, %v393, %v391
  %v396 = vsel %vm59, %v349, %v394
  %v397 = vsel %vm60, %v348, %v395
  %v398 = vpack.c.bf16 %v396, %v396
  %v399 = vpack.c.bf16 %v397, %v397
  %400 = vst [vmem:[#allocation2 + $0x70] sm:$0xf] %v398
  %401 = vst [vmem:[#allocation2 + $0x78] sm:$0xf] %v399
  %402 = vrot.lane.b32.xlu0 %v308, 97
  %v403 = vpop.permute.xlu0 %402
  %404 = vrot.lane.b32.xlu0 %v309, 97
  %v405 = vpop.permute.xlu0 %404
  %v406 = vsel %vm166, %v403, %v405
  %v407 = vsel %vm166, %v405, %v403
  %v408 = vsel %vm57, %v406, %v372
  %v409 = vsel %vm58, %v407, %v373
  %v410 = vpack.c.bf16 %v408, %v408
  %v411 = vpack.c.bf16 %v409, %v409
  %v414 = vrot.slane %v410, 4
  %v415 = vrot.slane %v411, 4
  %418 = vst [vmem:[#allocation2 + $0x70] sm:$0xf0] %v414
  %419 = vst [vmem:[#allocation2 + $0x78] sm:$0xf0] %v415
  %420 = vrot.lane.b32.xlu0 %v308, 112
  %v421 = vpop.permute.xlu0 %420
  %422 = vrot.lane.b32.xlu0 %v309, 112
  %v423 = vpop.permute.xlu0 %422
  %v424 = vsel %vm179, %v421, %v423
  %v425 = vsel %vm179, %v423, %v421
  %v426 = vpack.c.bf16 %v424, %v424
  %v427 = vpack.c.bf16 %v425, %v425
  %428 = vst [vmem:[#allocation2 + $0x80] sm:$0xf] %v426
  %429 = vst [vmem:[#allocation2 + $0x88] sm:$0xf] %v427
  %430 = vrot.lane.b32.xlu0 %v308, 111
  %v431 = vpop.permute.xlu0 %430
  %432 = vrot.lane.b32.xlu0 %v309, 111
  %v433 = vpop.permute.xlu0 %432
  %v434 = vsel %vm196, %v431, %v433
  %v435 = vsel %vm196, %v433, %v431
  %v436 = vsel %vm59, %v394, %v434
  %v437 = vsel %vm60, %v395, %v435
  %v438 = vpack.c.bf16 %v436, %v436
  %v439 = vpack.c.bf16 %v437, %v437
  %v442 = vrot.slane %v438, 4
  %v443 = vrot.slane %v439, 4
  %446 = vst [vmem:[#allocation2 + $0x80] sm:$0xf0] %v442
  %447 = vst [vmem:[#allocation2 + $0x88] sm:$0xf0] %v443
  %v448 = vld [vmem:[%s2] sm:$0xff]
  %v449 = vld [vmem:[#allocation2] sm:$0xff]
  %v450 = vld [vmem:[#allocation2 + $0x8] sm:$0xff]
  %v451 = vld [vmem:[#allocation2 + $0x10] sm:$0xff]
  %v452 = vld [vmem:[#allocation2 + $0x18] sm:$0xff]
  %v453 = vld [vmem:[#allocation2 + $0x20] sm:$0xff]
  %v454 = vld [vmem:[#allocation2 + $0x28] sm:$0xff]
  %v455 = vld [vmem:[#allocation2 + $0x30] sm:$0xff]
  %v456 = vld [vmem:[#allocation2 + $0x38] sm:$0xff]
  %v457 = vld [vmem:[#allocation2 + $0x40] sm:$0xff]
  %v458 = vld [vmem:[#allocation2 + $0x48] sm:$0xff]
  %v459 = vld [vmem:[#allocation2 + $0x50] sm:$0xff]
  %v460 = vld [vmem:[#allocation2 + $0x58] sm:$0xff]
  %v461 = vld [vmem:[#allocation2 + $0x60] sm:$0xff]
  %v462 = vld [vmem:[#allocation2 + $0x68] sm:$0xff]
  %v463 = vld [vmem:[#allocation2 + $0x70] sm:$0xff]
  %v464 = vld [vmem:[#allocation2 + $0x78] sm:$0xff]
  %v465 = vld [vmem:[#allocation2 + $0x80] sm:$0xff]
  %v466 = vld [vmem:[#allocation2 + $0x88] sm:$0xff]
  %s467 = scalar_lea.vmem %s5, 8
  %v468 = vld [vmem:[%s467] sm:$0xff]
  %470 = vset.pattern.permute.xlu0 0
  %471 = vperm.xlu0 %470, %v468
  %v472 = vpop.permute.xlu0 %471
  %v475 = vunpack.c.l.b16 %v448
  %v476 = vunpack.c.h.b16 %v448
  %v477 = vpack.c.b16 %v475, %v475
  %v478 = vpack.c.b16 %v476, %v476
  %vm480 = vcmask 130048
  %v482 = vsel %vm480, %v478, 0
  %484 = vmatprep.subr.bf16.mxu0 %v450
  %485 = vmatpush1.bf16.msra.mxu0 %v449
  %486 = vmatprep.subr.bf16.mxu0 %v452
  %487 = vmatpush1.bf16.msra.mxu0 %v451
  %488 = vmatprep.subr.bf16.mxu0 %v454
  %489 = vmatpush1.bf16.msra.mxu0 %v453
  %490 = vmatprep.subr.bf16.mxu0 %v456
  %491 = vmatpush1.bf16.msra.mxu0 %v455
  %492 = vmatprep.subr.bf16.mxu0 %v458
  %493 = vmatpush1.bf16.msra.mxu0 %v457
  %494 = vmatprep.subr.bf16.mxu0 %v460
  %495 = vmatpush1.bf16.msra.mxu0 %v459
  %496 = vmatprep.subr.bf16.mxu0 %v462
  %497 = vmatpush1.bf16.msra.mxu0 %v461
  %498 = vmatprep.subr.bf16.mxu0 %v464
  %499 = vmatpush1.bf16.msra.mxu0 %v463
  %500 = vmatprep.subr.bf16.mxu0 %v466
  %501 = vmatpush1.bf16.msra.mxu0 %v465
  %502 = vmatprep.subr.bf16.mxu0 0
  %503 = vmatpush1.bf16.msra.mxu0 0
  %504 = vmatprep.subr.bf16.mxu0 0
  %505 = vmatpush1.bf16.msra.mxu0 0
  %506 = vmatprep.subr.bf16.mxu0 0
  %507 = vmatpush1.bf16.msra.mxu0 0
  %508 = vmatprep.subr.bf16.mxu0 0
  %509 = vmatpush1.bf16.msra.mxu0 0
  %510 = vmatprep.subr.bf16.mxu0 0
  %511 = vmatpush1.bf16.msra.mxu0 0
  %512 = vmatprep.subr.bf16.mxu0 0
  %513 = vmatpush1.bf16.msra.mxu0 0
  %514 = vmatprep.subr.bf16.mxu0 0
  %515 = vmatpush1.bf16.msra.mxu0 0
  %516 = vmatprep.mubr.bf16.mxu0 %v482
  %517 = vmatmul.mubr.bf16.gmra.mrb[0].mxu0 %v477
  %v518 = vpop.f32.mrb[0].mxu0
  %v519 = vadd.f32 %v472, %v518
  %v520 = vpop.f32.mrb[0].mxu0
  %v521 = vadd.f32 %v472, %v520
  %v522 = vpop.f32.mrb[0].mxu0
  %v523 = vpop.f32.mrb[0].mxu0
  %524 = vdwg.mxu0
  %v525 = vmax.f32 %v519, 0.0
  %v526 = vmax.f32 %v521, 0.0
  %v527 = vadd.f32 %v525, %v526
  %528 = vadd.xlane.f32.xlu0 %v527
  %v529 = vpop.xlane.xlu0 %528
  %v530 = vmul.f32 %v525, %v525
  %v531 = vmul.f32 %v526, %v526
  %v532 = vadd.f32 %v530, %v531
  %533 = vadd.xlane.f32.xlu0 %v532
  %v534 = vpop.xlane.xlu0 %533
  %v535 = vmul.f32 %v529, 0.00390625
  %v536 = vmul.f32 %v534, 0.00390625
  %v537 = vmul.f32 %v535, %v535
  %v538 = vsub.f32 %v536, %v537
  %v539 = vmax.f32 %v538, 0.0
  %v540 = vadd.f32 %v539, 1e-05
  %v541 = vrsqrt.pop %v540
  %s542 = scalar_lea.vmem %s6, 8
  %v543 = vld [vmem:[%s542] sm:$0xff]
  %v544 = vmul.f32 %v541, %v543
  %546 = vset.pattern.permute.xlu0 0
  %547 = vperm.xlu0 %546, %v544
  %v548 = vpop.permute.xlu0 %547
  %v550 = vmul.f32 %v525, %v548
  %v551 = vmul.f32 %v526, %v548
  %s552 = scalar_lea.vmem %s7, 8
  %v553 = vld [vmem:[%s552] sm:$0xff]
  %v554 = vmul.f32 %v535, %v544
  %v555 = vsub.f32 %v553, %v554
  %557 = vset.pattern.permute.xlu0 0
  %558 = vperm.xlu0 %557, %v555
  %v559 = vpop.permute.xlu0 %558
  %v561 = vadd.f32 %v550, %v559
  %v562 = vadd.f32 %v551, %v559
  %563 = vrot.lane.b32.xlu0 %v561, 17
  %v564 = vpop.permute.xlu0 %563
  %565 = vrot.lane.b32.xlu0 %v562, 17
  %v566 = vpop.permute.xlu0 %565
  %v567 = vsel %vm67, %v564, %v566
  %v568 = vsel %vm67, %v566, %v564
  %569 = vrot.lane.b32.xlu0 %v561, 1
  %v570 = vpop.permute.xlu0 %569
  %571 = vrot.lane.b32.xlu0 %v562, 1
  %v572 = vpop.permute.xlu0 %571
  %v573 = vsel %vm74, %v570, %v572
  %v574 = vsel %vm74, %v572, %v570
  %v575 = vsel %vm57, %v574, %v568
  %v576 = vsel %vm58, %v573, %v567
  %v577 = vpack.c.bf16 %v575, %v575
  %v578 = vpack.c.bf16 %v576, %v576
  %579 = vst [vmem:[#allocation2 + $0x90] sm:$0xf] %v577
  %580 = vst [vmem:[#allocation2 + $0x98] sm:$0xf] %v578
  %581 = vrot.lane.b32.xlu0 %v561, 16
  %v582 = vpop.permute.xlu0 %581
  %583 = vrot.lane.b32.xlu0 %v562, 16
  %v584 = vpop.permute.xlu0 %583
  %v585 = vsel %vm87, %v582, %v584
  %v586 = vsel %vm87, %v584, %v582
  %v587 = vpack.c.bf16 %v586, %v586
  %v588 = vpack.c.bf16 %v585, %v585
  %v591 = vrot.slane %v587, 4
  %v592 = vrot.slane %v588, 4
  %595 = vst [vmem:[#allocation2 + $0x90] sm:$0xf0] %v591
  %596 = vst [vmem:[#allocation2 + $0x98] sm:$0xf0] %v592
  %597 = vrot.lane.b32.xlu0 %v561, 15
  %v598 = vpop.permute.xlu0 %597
  %599 = vrot.lane.b32.xlu0 %v562, 15
  %v600 = vpop.permute.xlu0 %599
  %v601 = vsel %vm104, %v598, %v600
  %v602 = vsel %vm104, %v600, %v598
  %603 = vrot.lane.b32.xlu0 %v561, 31
  %v604 = vpop.permute.xlu0 %603
  %605 = vrot.lane.b32.xlu0 %v562, 31
  %v606 = vpop.permute.xlu0 %605
  %v607 = vsel %vm111, %v604, %v606
  %v608 = vsel %vm111, %v606, %v604
  %v609 = vsel %vm59, %v608, %v602
  %v610 = vsel %vm60, %v607, %v601
  %v611 = vpack.c.bf16 %v609, %v609
  %v612 = vpack.c.bf16 %v610, %v610
  %613 = vst [vmem:[#allocation2 + $0xa0] sm:$0xf] %v611
  %614 = vst [vmem:[#allocation2 + $0xa8] sm:$0xf] %v612
  %615 = vrot.lane.b32.xlu0 %v561, 113
  %v616 = vpop.permute.xlu0 %615
  %617 = vrot.lane.b32.xlu0 %v562, 113
  %v618 = vpop.permute.xlu0 %617
  %v619 = vsel %vm124, %v616, %v618
  %v620 = vsel %vm124, %v618, %v616
  %v621 = vsel %vm57, %v619, %v574
  %v622 = vsel %vm58, %v620, %v573
  %v623 = vpack.c.bf16 %v621, %v621
  %v624 = vpack.c.bf16 %v622, %v622
  %v627 = vrot.slane %v623, 4
  %v628 = vrot.slane %v624, 4
  %631 = vst [vmem:[#allocation2 + $0xa0] sm:$0xf0] %v627
  %632 = vst [vmem:[#allocation2 + $0xa8] sm:$0xf0] %v628
  %v633 = vpack.c.bf16 %v561, %v561
  %v634 = vpack.c.bf16 %v562, %v562
  %635 = vst [vmem:[#allocation2 + $0xb0] sm:$0xf] %v633
  %636 = vst [vmem:[#allocation2 + $0xb8] sm:$0xf] %v634
  %637 = vrot.lane.b32.xlu0 %v561, 127
  %v638 = vpop.permute.xlu0 %637
  %639 = vrot.lane.b32.xlu0 %v562, 127
  %v640 = vpop.permute.xlu0 %639
  %v641 = vsel %vm147, %v638, %v640
  %v642 = vsel %vm147, %v640, %v638
  %v643 = vsel %vm59, %v602, %v641
  %v644 = vsel %vm60, %v601, %v642
  %v645 = vpack.c.bf16 %v643, %v643
  %v646 = vpack.c.bf16 %v644, %v644
  %v649 = vrot.slane %v645, 4
  %v650 = vrot.slane %v646, 4
  %653 = vst [vmem:[#allocation2 + $0xb0] sm:$0xf0] %v649
  %654 = vst [vmem:[#allocation2 + $0xb8] sm:$0xf0] %v650
  %655 = vrot.lane.b32.xlu0 %v561, 97
  %v656 = vpop.permute.xlu0 %655
  %657 = vrot.lane.b32.xlu0 %v562, 97
  %v658 = vpop.permute.xlu0 %657
  %v659 = vsel %vm166, %v656, %v658
  %v660 = vsel %vm166, %v658, %v656
  %v661 = vsel %vm57, %v659, %v619
  %v662 = vsel %vm58, %v660, %v620
  %v663 = vpack.c.bf16 %v661, %v661
  %v664 = vpack.c.bf16 %v662, %v662
  %665 = vst [vmem:[#allocation2 + $0xc0] sm:$0xf] %v663
  %666 = vst [vmem:[#allocation2 + $0xc8] sm:$0xf] %v664
  %667 = vrot.lane.b32.xlu0 %v561, 112
  %v668 = vpop.permute.xlu0 %667
  %669 = vrot.lane.b32.xlu0 %v562, 112
  %v670 = vpop.permute.xlu0 %669
  %v671 = vsel %vm179, %v668, %v670
  %v672 = vsel %vm179, %v670, %v668
  %v673 = vpack.c.bf16 %v671, %v671
  %v674 = vpack.c.bf16 %v672, %v672
  %v677 = vrot.slane %v673, 4
  %v678 = vrot.slane %v674, 4
  %681 = vst [vmem:[#allocation2 + $0xc0] sm:$0xf0] %v677
  %682 = vst [vmem:[#allocation2 + $0xc8] sm:$0xf0] %v678
  %683 = vrot.lane.b32.xlu0 %v561, 111
  %v684 = vpop.permute.xlu0 %683
  %685 = vrot.lane.b32.xlu0 %v562, 111
  %v686 = vpop.permute.xlu0 %685
  %v687 = vsel %vm196, %v684, %v686
  %v688 = vsel %vm196, %v686, %v684
  %v689 = vsel %vm59, %v641, %v687
  %v690 = vsel %vm60, %v642, %v688
  %v691 = vpack.c.bf16 %v689, %v689
  %v692 = vpack.c.bf16 %v690, %v690
  %693 = vst [vmem:[#allocation2 + $0xd0] sm:$0xf] %v691
  %694 = vst [vmem:[#allocation2 + $0xd8] sm:$0xf] %v692
  %v695 = vld [vmem:[%s3] sm:$0xff]
  %v696 = vld [vmem:[#allocation2] sm:$0xff]
  %v697 = vld [vmem:[#allocation2 + $0x8] sm:$0xff]
  %v698 = vld [vmem:[#allocation2 + $0x10] sm:$0xff]
  %v699 = vld [vmem:[#allocation2 + $0x18] sm:$0xff]
  %v700 = vld [vmem:[#allocation2 + $0x20] sm:$0xff]
  %v701 = vld [vmem:[#allocation2 + $0x28] sm:$0xff]
  %v702 = vld [vmem:[#allocation2 + $0x30] sm:$0xff]
  %v703 = vld [vmem:[#allocation2 + $0x38] sm:$0xff]
  %v704 = vld [vmem:[#allocation2 + $0x40] sm:$0xff]
  %v705 = vld [vmem:[#allocation2 + $0x48] sm:$0xff]
  %v706 = vld [vmem:[#allocation2 + $0x50] sm:$0xff]
  %v707 = vld [vmem:[#allocation2 + $0x58] sm:$0xff]
  %v708 = vld [vmem:[#allocation2 + $0x60] sm:$0xff]
  %v709 = vld [vmem:[#allocation2 + $0x68] sm:$0xff]
  %v710 = vld [vmem:[#allocation2 + $0x70] sm:$0xff]
  %v711 = vld [vmem:[#allocation2 + $0x78] sm:$0xff]
  %v712 = vld [vmem:[#allocation2 + $0x80] sm:$0xff]
  %v713 = vld [vmem:[#allocation2 + $0x88] sm:$0xff]
  %v714 = vld [vmem:[#allocation2 + $0x90] sm:$0xff]
  %v715 = vld [vmem:[#allocation2 + $0x98] sm:$0xff]
  %v716 = vld [vmem:[#allocation2 + $0xa0] sm:$0xff]
  %v717 = vld [vmem:[#allocation2 + $0xa8] sm:$0xff]
  %v718 = vld [vmem:[#allocation2 + $0xb0] sm:$0xff]
  %v719 = vld [vmem:[#allocation2 + $0xb8] sm:$0xff]
  %v720 = vld [vmem:[#allocation2 + $0xc0] sm:$0xff]
  %v721 = vld [vmem:[#allocation2 + $0xc8] sm:$0xff]
  %v722 = vld [vmem:[#allocation2 + $0xd0] sm:$0xf]
  %v723 = vld [vmem:[#allocation2 + $0xd8] sm:$0xf]
  %s724 = scalar_lea.vmem %s5, 16
  %v725 = vld [vmem:[%s724] sm:$0xff]
  %727 = vset.pattern.permute.xlu0 0
  %728 = vperm.xlu0 %727, %v725
  %v729 = vpop.permute.xlu0 %728
  %v732 = vunpack.c.l.b16 %v695
  %v733 = vunpack.c.h.b16 %v695
  %v734 = vpack.c.b16 %v732, %v732
  %v735 = vpack.c.b16 %v733, %v733
  %vm737 = vcmask 719872
  %v739 = vsel %vm737, %v735, 0
  %v742 = vsel %vm226, %v722, 0
  %v745 = vsel %vm226, %v723, 0
  %747 = vmatprep.subr.bf16.mxu0 %v697
  %748 = vmatpush1.bf16.msra.mxu0 %v696
  %749 = vmatprep.subr.bf16.mxu0 %v699
  %750 = vmatpush1.bf16.msra.mxu0 %v698
  %751 = vmatprep.subr.bf16.mxu0 %v701
  %752 = vmatpush1.bf16.msra.mxu0 %v700
  %753 = vmatprep.subr.bf16.mxu0 %v703
  %754 = vmatpush1.bf16.msra.mxu0 %v702
  %755 = vmatprep.subr.bf16.mxu0 %v705
  %756 = vmatpush1.bf16.msra.mxu0 %v704
  %757 = vmatprep.subr.bf16.mxu0 %v707
  %758 = vmatpush1.bf16.msra.mxu0 %v706
  %759 = vmatprep.subr.bf16.mxu0 %v709
  %760 = vmatpush1.bf16.msra.mxu0 %v708
  %761 = vmatprep.subr.bf16.mxu0 %v711
  %762 = vmatpush1.bf16.msra.mxu0 %v710
  %763 = vmatprep.subr.bf16.mxu0 %v713
  %764 = vmatpush1.bf16.msra.mxu0 %v712
  %765 = vmatprep.subr.bf16.mxu0 %v715
  %766 = vmatpush1.bf16.msra.mxu0 %v714
  %767 = vmatprep.subr.bf16.mxu0 %v717
  %768 = vmatpush1.bf16.msra.mxu0 %v716
  %769 = vmatprep.subr.bf16.mxu0 %v719
  %770 = vmatpush1.bf16.msra.mxu0 %v718
  %771 = vmatprep.subr.bf16.mxu0 %v721
  %772 = vmatpush1.bf16.msra.mxu0 %v720
  %773 = vmatprep.subr.bf16.mxu0 %v745
  %774 = vmatpush1.bf16.msra.mxu0 %v742
  %775 = vmatprep.subr.bf16.mxu0 0
  %776 = vmatpush1.bf16.msra.mxu0 0
  %777 = vmatprep.subr.bf16.mxu0 0
  %778 = vmatpush1.bf16.msra.mxu0 0
  %779 = vmatprep.mubr.bf16.mxu0 %v739
  %780 = vmatmul.mubr.bf16.gmra.mrb[0].mxu0 %v734
  %v781 = vpop.f32.mrb[0].mxu0
  %v782 = vadd.f32 %v729, %v781
  %v783 = vpop.f32.mrb[0].mxu0
  %v784 = vadd.f32 %v729, %v783
  %v785 = vpop.f32.mrb[0].mxu0
  %v786 = vpop.f32.mrb[0].mxu0
  %787 = vdwg.mxu0
  %v788 = vmax.f32 %v782, 0.0
  %v789 = vmax.f32 %v784, 0.0
  %v790 = vadd.f32 %v788, %v789
  %791 = vadd.xlane.f32.xlu0 %v790
  %v792 = vpop.xlane.xlu0 %791
  %v793 = vmul.f32 %v788, %v788
  %v794 = vmul.f32 %v789, %v789
  %v795 = vadd.f32 %v793, %v794
  %796 = vadd.xlane.f32.xlu0 %v795
  %v797 = vpop.xlane.xlu0 %796
  %v798 = vmul.f32 %v792, 0.00390625
  %v799 = vmul.f32 %v797, 0.00390625
  %v800 = vmul.f32 %v798, %v798
  %v801 = vsub.f32 %v799, %v800
  %v802 = vmax.f32 %v801, 0.0
  %v803 = vadd.f32 %v802, 1e-05
  %v804 = vrsqrt.pop %v803
  %s805 = scalar_lea.vmem %s6, 16
  %v806 = vld [vmem:[%s805] sm:$0xff]
  %v807 = vmul.f32 %v804, %v806
  %809 = vset.pattern.permute.xlu0 0
  %810 = vperm.xlu0 %809, %v807
  %v811 = vpop.permute.xlu0 %810
  %v813 = vmul.f32 %v788, %v811
  %v814 = vmul.f32 %v789, %v811
  %s815 = scalar_lea.vmem %s7, 16
  %v816 = vld [vmem:[%s815] sm:$0xff]
  %v817 = vmul.f32 %v798, %v807
  %v818 = vsub.f32 %v816, %v817
  %820 = vset.pattern.permute.xlu0 0
  %821 = vperm.xlu0 %820, %v818
  %v822 = vpop.permute.xlu0 %821
  %v824 = vadd.f32 %v813, %v822
  %v825 = vadd.f32 %v814, %v822
  %826 = vrot.lane.b32.xlu0 %v824, 17
  %v827 = vpop.permute.xlu0 %826
  %828 = vrot.lane.b32.xlu0 %v825, 17
  %v829 = vpop.permute.xlu0 %828
  %v830 = vsel %vm67, %v827, %v829
  %v831 = vsel %vm67, %v829, %v827
  %832 = vrot.lane.b32.xlu0 %v824, 1
  %v833 = vpop.permute.xlu0 %832
  %834 = vrot.lane.b32.xlu0 %v825, 1
  %v835 = vpop.permute.xlu0 %834
  %v836 = vsel %vm74, %v833, %v835
  %v837 = vsel %vm74, %v835, %v833
  %v838 = vsel %vm57, %v837, %v831
  %v839 = vsel %vm58, %v836, %v830
  %v840 = vpack.c.bf16 %v838, %v838
  %v841 = vpack.c.bf16 %v839, %v839
  %v844 = vrot.slane %v840, 4
  %v845 = vrot.slane %v841, 4
  %848 = vst [vmem:[#allocation2 + $0xd0] sm:$0xf0] %v844
  %849 = vst [vmem:[#allocation2 + $0xd8] sm:$0xf0] %v845
  %850 = vrot.lane.b32.xlu0 %v824, 16
  %v851 = vpop.permute.xlu0 %850
  %852 = vrot.lane.b32.xlu0 %v825, 16
  %v853 = vpop.permute.xlu0 %852
  %v854 = vsel %vm87, %v851, %v853
  %v855 = vsel %vm87, %v853, %v851
  %v856 = vpack.c.bf16 %v855, %v855
  %v857 = vpack.c.bf16 %v854, %v854
  %858 = vst [vmem:[#allocation2 + $0xe0] sm:$0xf] %v856
  %859 = vst [vmem:[#allocation2 + $0xe8] sm:$0xf] %v857
  %860 = vrot.lane.b32.xlu0 %v824, 15
  %v861 = vpop.permute.xlu0 %860
  %862 = vrot.lane.b32.xlu0 %v825, 15
  %v863 = vpop.permute.xlu0 %862
  %v864 = vsel %vm104, %v861, %v863
  %v865 = vsel %vm104, %v863, %v861
  %866 = vrot.lane.b32.xlu0 %v824, 31
  %v867 = vpop.permute.xlu0 %866
  %868 = vrot.lane.b32.xlu0 %v825, 31
  %v869 = vpop.permute.xlu0 %868
  %v870 = vsel %vm111, %v867, %v869
  %v871 = vsel %vm111, %v869, %v867
  %v872 = vsel %vm59, %v871, %v865
  %v873 = vsel %vm60, %v870, %v864
  %v874 = vpack.c.bf16 %v872, %v872
  %v875 = vpack.c.bf16 %v873, %v873
  %v878 = vrot.slane %v874, 4
  %v879 = vrot.slane %v875, 4
  %882 = vst [vmem:[#allocation2 + $0xe0] sm:$0xf0] %v878
  %883 = vst [vmem:[#allocation2 + $0xe8] sm:$0xf0] %v879
  %884 = vrot.lane.b32.xlu0 %v824, 113
  %v885 = vpop.permute.xlu0 %884
  %886 = vrot.lane.b32.xlu0 %v825, 113
  %v887 = vpop.permute.xlu0 %886
  %v888 = vsel %vm124, %v885, %v887
  %v889 = vsel %vm124, %v887, %v885
  %v890 = vsel %vm57, %v888, %v837
  %v891 = vsel %vm58, %v889, %v836
  %v892 = vpack.c.bf16 %v890, %v890
  %v893 = vpack.c.bf16 %v891, %v891
  %894 = vst [vmem:[#allocation2 + $0xf0] sm:$0xf] %v892
  %895 = vst [vmem:[#allocation2 + $0xf8] sm:$0xf] %v893
  %v896 = vpack.c.bf16 %v824, %v824
  %v897 = vpack.c.bf16 %v825, %v825
  %v900 = vrot.slane %v896, 4
  %v901 = vrot.slane %v897, 4
  %904 = vst [vmem:[#allocation2 + $0xf0] sm:$0xf0] %v900
  %905 = vst [vmem:[#allocation2 + $0xf8] sm:$0xf0] %v901
  %906 = vrot.lane.b32.xlu0 %v824, 127
  %v907 = vpop.permute.xlu0 %906
  %908 = vrot.lane.b32.xlu0 %v825, 127
  %v909 = vpop.permute.xlu0 %908
  %v910 = vsel %vm147, %v907, %v909
  %v911 = vsel %vm147, %v909, %v907
  %v912 = vsel %vm59, %v865, %v910
  %v913 = vsel %vm60, %v864, %v911
  %v914 = vpack.c.bf16 %v912, %v912
  %v915 = vpack.c.bf16 %v913, %v913
  %916 = vst [vmem:[#allocation2 + $0x100] sm:$0xf] %v914
  %917 = vst [vmem:[#allocation2 + $0x108] sm:$0xf] %v915
  %918 = vrot.lane.b32.xlu0 %v824, 97
  %v919 = vpop.permute.xlu0 %918
  %920 = vrot.lane.b32.xlu0 %v825, 97
  %v921 = vpop.permute.xlu0 %920
  %v922 = vsel %vm166, %v919, %v921
  %v923 = vsel %vm166, %v921, %v919
  %v924 = vsel %vm57, %v922, %v888
  %v925 = vsel %vm58, %v923, %v889
  %v926 = vpack.c.bf16 %v924, %v924
  %v927 = vpack.c.bf16 %v925, %v925
  %v930 = vrot.slane %v926, 4
  %v931 = vrot.slane %v927, 4
  %934 = vst [vmem:[#allocation2 + $0x100] sm:$0xf0] %v930
  %935 = vst [vmem:[#allocation2 + $0x108] sm:$0xf0] %v931
  %936 = vrot.lane.b32.xlu0 %v824, 112
  %v937 = vpop.permute.xlu0 %936
  %938 = vrot.lane.b32.xlu0 %v825, 112
  %v939 = vpop.permute.xlu0 %938
  %v940 = vsel %vm179, %v937, %v939
  %v941 = vsel %vm179, %v939, %v937
  %v942 = vpack.c.bf16 %v940, %v940
  %v943 = vpack.c.bf16 %v941, %v941
  %944 = vst [vmem:[#allocation2 + $0x110] sm:$0xf] %v942
  %945 = vst [vmem:[#allocation2 + $0x118] sm:$0xf] %v943
  %946 = vrot.lane.b32.xlu0 %v824, 111
  %v947 = vpop.permute.xlu0 %946
  %948 = vrot.lane.b32.xlu0 %v825, 111
  %v949 = vpop.permute.xlu0 %948
  %v950 = vsel %vm196, %v947, %v949
  %v951 = vsel %vm196, %v949, %v947
  %v952 = vsel %vm59, %v910, %v950
  %v953 = vsel %vm60, %v911, %v951
  %v954 = vpack.c.bf16 %v952, %v952
  %v955 = vpack.c.bf16 %v953, %v953
  %v958 = vrot.slane %v954, 4
  %v959 = vrot.slane %v955, 4
  %962 = vst [vmem:[#allocation2 + $0x110] sm:$0xf0] %v958
  %963 = vst [vmem:[#allocation2 + $0x118] sm:$0xf0] %v959
  %v964 = vld [vmem:[%s4] sm:$0xff]
  %v965 = vld [vmem:[%s4 + $0x8] sm:$0xf]
  %v966 = vld [vmem:[#allocation2] sm:$0xff]
  %v967 = vld [vmem:[#allocation2 + $0x8] sm:$0xff]
  %v968 = vld [vmem:[#allocation2 + $0x10] sm:$0xff]
  %v969 = vld [vmem:[#allocation2 + $0x18] sm:$0xff]
  %v970 = vld [vmem:[#allocation2 + $0x20] sm:$0xff]
  %v971 = vld [vmem:[#allocation2 + $0x28] sm:$0xff]
  %v972 = vld [vmem:[#allocation2 + $0x30] sm:$0xff]
  %v973 = vld [vmem:[#allocation2 + $0x38] sm:$0xff]
  %v974 = vld [vmem:[#allocation2 + $0x40] sm:$0xff]
  %v975 = vld [vmem:[#allocation2 + $0x48] sm:$0xff]
  %v976 = vld [vmem:[#allocation2 + $0x50] sm:$0xff]
  %v977 = vld [vmem:[#allocation2 + $0x58] sm:$0xff]
  %v978 = vld [vmem:[#allocation2 + $0x60] sm:$0xff]
  %v979 = vld [vmem:[#allocation2 + $0x68] sm:$0xff]
  %v980 = vld [vmem:[#allocation2 + $0x70] sm:$0xff]
  %v981 = vld [vmem:[#allocation2 + $0x78] sm:$0xff]
  %v982 = vld [vmem:[#allocation2 + $0x80] sm:$0xff]
  %v983 = vld [vmem:[#allocation2 + $0x88] sm:$0xff]
  %v984 = vld [vmem:[#allocation2 + $0x90] sm:$0xff]
  %v985 = vld [vmem:[#allocation2 + $0x98] sm:$0xff]
  %v986 = vld [vmem:[#allocation2 + $0xa0] sm:$0xff]
  %v987 = vld [vmem:[#allocation2 + $0xa8] sm:$0xff]
  %v988 = vld [vmem:[#allocation2 + $0xb0] sm:$0xff]
  %v989 = vld [vmem:[#allocation2 + $0xb8] sm:$0xff]
  %v990 = vld [vmem:[#allocation2 + $0xc0] sm:$0xff]
  %v991 = vld [vmem:[#allocation2 + $0xc8] sm:$0xff]
  %v992 = vld [vmem:[#allocation2 + $0xd0] sm:$0xff]
  %v993 = vld [vmem:[#allocation2 + $0xd8] sm:$0xff]
  %v994 = vld [vmem:[#allocation2 + $0xe0] sm:$0xff]
  %v995 = vld [vmem:[#allocation2 + $0xe8] sm:$0xff]
  %v996 = vld [vmem:[#allocation2 + $0xf0] sm:$0xff]
  %v997 = vld [vmem:[#allocation2 + $0xf8] sm:$0xff]
  %v998 = vld [vmem:[#allocation2 + $0x100] sm:$0xff]
  %v999 = vld [vmem:[#allocation2 + $0x108] sm:$0xff]
  %v1000 = vld [vmem:[#allocation2 + $0x110] sm:$0xff]
  %v1001 = vld [vmem:[#allocation2 + $0x118] sm:$0xff]
  %s1002 = scalar_lea.vmem %s5, 24
  %v1003 = vld [vmem:[%s1002] sm:$0xff]
  %1005 = vset.pattern.permute.xlu0 0
  %1006 = vperm.xlu0 %1005, %v1003
  %v1007 = vpop.permute.xlu0 %1006
  %v1011 = vunpack.c.l.b16 %v964
  %v1012 = vunpack.c.h.b16 %v964
  %v1013 = vunpack.c.l.b16 %v965
  %v1014 = vpack.c.b16 %v1011, %v1011
  %v1015 = vpack.c.b16 %v1012, %v1012
  %v1016 = vpack.c.b16 %v1013, %v1013
  %vm1019 = vcmask 261120
  %v1021 = vsel %vm1019, %v1016, 0
  %1023 = vmatprep.subr.bf16.mxu0 %v967
  %1024 = vmatpush1.bf16.msra.mxu0 %v966
  %1025 = vmatprep.subr.bf16.mxu0 %v969
  %1026 = vmatpush1.bf16.msra.mxu0 %v968
  %1027 = vmatprep.subr.bf16.mxu0 %v971
  %1028 = vmatpush1.bf16.msra.mxu0 %v970
  %1029 = vmatprep.subr.bf16.mxu0 %v973
  %1030 = vmatpush1.bf16.msra.mxu0 %v972
  %1031 = vmatprep.subr.bf16.mxu0 %v975
  %1032 = vmatpush1.bf16.msra.mxu0 %v974
  %1033 = vmatprep.subr.bf16.mxu0 %v977
  %1034 = vmatpush1.bf16.msra.mxu0 %v976
  %1035 = vmatprep.subr.bf16.mxu0 %v979
  %1036 = vmatpush1.bf16.msra.mxu0 %v978
  %1037 = vmatprep.subr.bf16.mxu0 %v981
  %1038 = vmatpush1.bf16.msra.mxu0 %v980
  %1039 = vmatprep.subr.bf16.mxu0 %v983
  %1040 = vmatpush1.bf16.msra.mxu0 %v982
  %1041 = vmatprep.subr.bf16.mxu0 %v985
  %1042 = vmatpush1.bf16.msra.mxu0 %v984
  %1043 = vmatprep.subr.bf16.mxu0 %v987
  %1044 = vmatpush1.bf16.msra.mxu0 %v986
  %1045 = vmatprep.subr.bf16.mxu0 %v989
  %1046 = vmatpush1.bf16.msra.mxu0 %v988
  %1047 = vmatprep.subr.bf16.mxu0 %v991
  %1048 = vmatpush1.bf16.msra.mxu0 %v990
  %1049 = vmatprep.subr.bf16.mxu0 %v993
  %1050 = vmatpush1.bf16.msra.mxu0 %v992
  %1051 = vmatprep.subr.bf16.mxu0 %v995
  %1052 = vmatpush1.bf16.msra.mxu0 %v994
  %1053 = vmatprep.subr.bf16.mxu0 %v997
  %1054 = vmatpush1.bf16.msra.mxu0 %v996
  %1055 = vmatprep.mubr.bf16.mxu0 %v1015
  %1056 = vmatmul.mubr.bf16.gmra.mrb[0].mxu0 %v1014
  %v1057 = vpop.f32.mrb[0].mxu0
  %v1058 = vadd.f32 %v1007, %v1057
  %v1059 = vpop.f32.mrb[0].mxu0
  %v1060 = vadd.f32 %v1007, %v1059
  %v1061 = vpop.f32.mrb[0].mxu0
  %v1062 = vpop.f32.mrb[0].mxu0
  %1063 = vdwg.mxu0
  %1064 = vmatprep.subr.bf16.mxu0 %v999
  %1065 = vmatpush1.bf16.msra.mxu0 %v998
  %1066 = vmatprep.subr.bf16.mxu0 %v1001
  %1067 = vmatpush1.bf16.msra.mxu0 %v1000
  %1068 = vmatprep.subr.bf16.mxu0 0
  %1069 = vmatpush1.bf16.msra.mxu0 0
  %1070 = vmatprep.subr.bf16.mxu0 0
  %1071 = vmatpush1.bf16.msra.mxu0 0
  %1072 = vmatprep.subr.bf16.mxu0 0
  %1073 = vmatpush1.bf16.msra.mxu0 0
  %1074 = vmatprep.subr.bf16.mxu0 0
  %1075 = vmatpush1.bf16.msra.mxu0 0
  %1076 = vmatprep.subr.bf16.mxu0 0
  %1077 = vmatpush1.bf16.msra.mxu0 0
  %1078 = vmatprep.subr.bf16.mxu0 0
  %1079 = vmatpush1.bf16.msra.mxu0 0
  %1080 = vmatprep.subr.bf16.mxu0 0
  %1081 = vmatpush1.bf16.msra.mxu0 0
  %1082 = vmatprep.subr.bf16.mxu0 0
  %1083 = vmatpush1.bf16.msra.mxu0 0
  %1084 = vmatprep.subr.bf16.mxu0 0
  %1085 = vmatpush1.bf16.msra.mxu0 0
  %1086 = vmatprep.subr.bf16.mxu0 0
  %1087 = vmatpush1.bf16.msra.mxu0 0
  %1088 = vmatprep.subr.bf16.mxu0 0
  %1089 = vmatpush1.bf16.msra.mxu0 0
  %1090 = vmatprep.subr.bf16.mxu0 0
  %1091 = vmatpush1.bf16.msra.mxu0 0
  %1092 = vmatprep.subr.bf16.mxu0 0
  %1093 = vmatpush1.bf16.msra.mxu0 0
  %1094 = vmatprep.subr.bf16.mxu0 0
  %1095 = vmatpush1.bf16.msra.mxu0 0
  %1096 = vmatprep.mubr.bf16.mxu0 0
  %1097 = vmatmul.mubr.bf16.gmra.mrb[0].mxu0 %v1021
  %v1098 = vpop.f32.mrb[0].mxu0
  %v1099 = vadd.f32 %v1058, %v1098
  %v1100 = vpop.f32.mrb[0].mxu0
  %v1101 = vadd.f32 %v1060, %v1100
  %v1102 = vpop.f32.mrb[0].mxu0
  %v1103 = vpop.f32.mrb[0].mxu0
  %1104 = vdwg.mxu0
  %1105 = vst [vmem:[%s8] sm:$0xff] %v1099
  %1106 = vst [vmem:[%s8 + $0x8] sm:$0xff] %v1101
  // Predicated region
  $region34: #{conv_block_ine_dense.1} parent=0 // pred_check
    _
  $region35: #{conv_block_ine_dense.1} parent=0 // pred_check_branch
    %1108 = sbr.rel (0) target = $region37
  $region36: #{conv_block_ine_dense.1} parent=0 // pred_region
    _
  $region37: #{conv_block_ine_dense.1} parent=0 // pred_fallthru
    _
  // Predicated region
  $region38: #{conv_block_ine_dense.1} parent=0 // pred_check
    _
  $region39: #{conv_block_ine_dense.1} parent=0 // pred_check_branch
    %1110 = sbr.rel (0) target = $region41
  $region40: #{conv_block_ine_dense.1} parent=0 // pred_region
    _
  $region41: #{conv_block_ine_dense.1} parent=0 // pred_fallthru
    _

</llo_original>
